<compile_context>
chip_gen: v7x
topology: tpu7x:2x2x1
jax: 0.10.0
libtpu: 0.0.40
codegen_flags: <defaults>
</compile_context>

<pallas_src>
import functools

import jax
import jax.numpy as jnp
from jax.experimental import pallas as pl
from jax.experimental.pallas import tpu as pltpu


def _round_up(n, m):
    return -(-n // m) * m


# ----------------------------------------------------------------------------
# Fused Pallas kernel: 3x3 conv -> +cond -> SiLU -> 3x3 conv, all batches in
# one grid step.  Layout: channels on sublanes, flattened H*W on lanes.
# ----------------------------------------------------------------------------
def _fused_ldm_kernel(ij_ref, x_ref, w1_ref, w2_ref, col_ref, o_ref, *, H, W):
    B, cout, M = o_ref.shape
    hid_pad = w1_ref.shape[0]
    f32, bf16 = jnp.float32, jnp.bfloat16

    def silu(v):                                   # f32 elementwise (VPU/EUP)
        return v * jax.nn.sigmoid(v)

    # Boundary validity, shared by both convs and all batch elements.
    # Exact integer row/col indices come precomputed -> no in-kernel division.
    ii = ij_ref[0:1, :]                            # (1, M) int32
    jj = ij_ref[1:2, :]
    row_ok = (ii >= 1, None, ii < H - 1)           # tap row offset -1, 0, +1
    col_ok = (jj >= 1, None, jj < W - 1)           # tap col offset -1, 0, +1

    def stack_taps(xt):
        # xt: (Cp, M) f32 -> (9*Cp, M) bf16; the 9 shifted+masked taps packed
        # along the contraction (sublane) axis.  Shifts are XLU rolls; the
        # center tap needs neither roll nor mask.
        taps = []
        for di in range(3):
            for dj in range(3):
                s = (di - 1) * W + (dj - 1)
                tap = xt if s == 0 else pltpu.roll(xt, (-s) % M, axis=1)
                m = row_ok[di]
                if col_ok[dj] is not None:
                    m = col_ok[dj] if m is None else (m & col_ok[dj])
                if m is not None:                  # "same" zero padding
                    tap = jnp.where(m, tap, 0.0)
                taps.append(tap)
        return jnp.concatenate(taps, axis=0).astype(bf16)

    def conv3x3(xt, w_ref, kchunk=256):
        # Packed-contraction conv: (Cout, 9*Cp) @ (9*Cp, M), K chunked <= 256.
        stacked = stack_taps(xt)
        k_tot = stacked.shape[0]
        acc = None
        for k0 in range(0, k_tot, kchunk):
            k1 = min(k_tot, k0 + kchunk)
            part = jnp.dot(w_ref[:, k0:k1], stacked[k0:k1, :],
                           preferred_element_type=f32)
            acc = part if acc is None else acc + part
        return acc

    for b in range(B):                             # static unroll, 1 grid step
        xt = x_ref[b]                                              # (cin_pad,M)
        a1 = conv3x3(xt, w1_ref) + col_ref[0:hid_pad, b:b + 1]     # +cond+b1
        h = silu(a1)                                               # (hid_pad,M)
        a2 = conv3x3(h, w2_ref) + col_ref[hid_pad:hid_pad + cout, b:b + 1]
        o_ref[b] = a2.astype(o_ref.dtype)          # lane-dense (M=H*W) store


# ----------------------------------------------------------------------------
# One-time weight packing into the kernel's MXU layout (outside the step loop).
# ----------------------------------------------------------------------------
def prepare_kernel_params(p):
    bf16 = jnp.bfloat16
    _, _, cin, hidden = p["conv1_w"].shape         # HWIO
    cout = p["conv2_w"].shape[3]
    cin_pad, hid_pad = _round_up(cin, 8), _round_up(hidden, 8)

    # (3,3,I,O) -> (O, 9, I); columns ordered [k = kh*3+kw, cin], zero-padded
    # so the in-kernel tap concat is sublane-tile aligned.
    w1 = jnp.transpose(p["conv1_w"], (3, 0, 1, 2)).reshape(hidden, 9, cin)
    w1 = jnp.pad(w1, ((0, hid_pad - hidden), (0, 0), (0, cin_pad - cin)))
    w2 = jnp.transpose(p["conv2_w"], (3, 0, 1, 2)).reshape(cout, 9, hidden)
    w2 = jnp.pad(w2, ((0, 0), (0, 0), (0, hid_pad - hidden)))

    kp = dict(p)
    kp["w1_mat"] = w1.reshape(hid_pad, 9 * cin_pad).astype(bf16)
    kp["w2_mat"] = w2.reshape(cout, 9 * hid_pad).astype(bf16)
    return kp


# ----------------------------------------------------------------------------
# Wrapper: build the packed operands and launch a single-step pallas_call.
# ----------------------------------------------------------------------------
def _fused_unet_call(cond, x_nchw, kp):
    B, C, H, W = x_nchw.shape
    M = H * W
    w1_mat, w2_mat = kp["w1_mat"], kp["w2_mat"]
    hid_pad = w1_mat.shape[0]
    cin_pad = w1_mat.shape[1] // 9
    hidden = kp["conv1_b"].shape[0]

    # f32 latent, channels padded to the f32 sublane tile; bf16 cast happens
    # on the packed taps inside the kernel (no extra bf16 copy of x in HBM).
    x_flat = jnp.pad(x_nchw.reshape(B, C, M),
                     ((0, 0), (0, cin_pad - C), (0, 0)))

    # Exact integer (row, col) index per flattened lane (constant-folded).
    r = jnp.arange(M, dtype=jnp.int32)
    ij = jnp.stack([r // W, r % W]).astype(jnp.int32)              # (2, M)

    # One packed column operand: rows [0:hid_pad] = cond + conv1 bias (per
    # batch column), rows [hid_pad:hid_pad+C] = conv2 bias (shared).
    col1 = (cond + kp["conv1_b"][None, :]).astype(jnp.float32).T   # (hidden,B)
    col1 = jnp.pad(col1, ((0, hid_pad - hidden), (0, 0)))
    col2 = jnp.broadcast_to(kp["conv2_b"][:, None], (C, B))
    colpack = jnp.concatenate([col1, col2], axis=0)                # (hid_pad+C,B)

    def full(a):                                   # whole-array VMEM block
        return pl.BlockSpec(a.shape, lambda g, nd=a.ndim: (0,) * nd)

    out = pl.pallas_call(
        functools.partial(_fused_ldm_kernel, H=H, W=W),
        out_shape=jax.ShapeDtypeStruct((B, C, M), jnp.float32),
        grid_spec=pltpu.PrefetchScalarGridSpec(
            num_scalar_prefetch=0,
            grid=(1,),                             # single pipeline step
            in_specs=[full(ij), full(x_flat), full(w1_mat), full(w2_mat),
                      full(colpack)],
            out_specs=pl.BlockSpec((B, C, M), lambda g: (0, 0, 0)),
        ),
    )(ij, x_flat, w1_mat, w2_mat, colpack)
    return out.reshape(B, C, H, W)


# ----------------------------------------------------------------------------
# Embeddings / parameters (stand-ins for modules not given in the prompt)
# ----------------------------------------------------------------------------
def time_embed(t, embed_dim, max_train_steps):
    # TODO(synk): TimeEmbed definition not provided; standard sinusoidal
    # timestep embedding of width embed_dim (must be even) is used.
    assert embed_dim % 2 == 0, "time_embed requires an even embed_dim"
    half = embed_dim // 2
    freqs = jnp.exp(-jnp.log(float(max_train_steps))
                    * jnp.arange(half, dtype=jnp.float32) / half)
    args = t.astype(jnp.float32)[..., None] * freqs
    return jnp.concatenate([jnp.sin(args), jnp.cos(args)], axis=-1)


def init_params(key, *, latent_dim, hidden, embed_dim, class_embed_dim,
                n_classes):
    ks = jax.random.split(key, 8)

    def lin(k, fan_in, fan_out):
        return (jax.random.normal(k, (fan_in, fan_out), jnp.float32)
                / jnp.sqrt(float(fan_in)))

    p = {}
    # TODO(synk): ClassEmbed definition not provided; nn.Embedding-style table.
    p["class_table"] = jax.random.normal(
        ks[0], (n_classes, class_embed_dim), jnp.float32)
    # condition_embed = Linear(class_embed_dim+embed_dim, embed_dim) -> SiLU
    #                   -> Linear(embed_dim, embed_dim)
    p["ce_w1"] = lin(ks[1], class_embed_dim + embed_dim, embed_dim)
    p["ce_b1"] = jnp.zeros((embed_dim,), jnp.float32)
    p["ce_w2"] = lin(ks[2], embed_dim, embed_dim)
    p["ce_b2"] = jnp.zeros((embed_dim,), jnp.float32)
    # Simplified conditional UNet (stand-in).  Conv weights are HWIO; real
    # PyTorch conv weights (O, I, kh, kw) must be permuted to (kh, kw, I, O)
    # before prepare_kernel_params.
    p["cproj_w"] = lin(ks[3], embed_dim, hidden)
    p["cproj_b"] = jnp.zeros((hidden,), jnp.float32)
    p["conv1_w"] = (jax.random.normal(ks[4], (3, 3, latent_dim, hidden),
                                      jnp.float32)
                    / jnp.sqrt(9.0 * latent_dim))
    p["conv1_b"] = jnp.zeros((hidden,), jnp.float32)
    p["conv2_w"] = (jax.random.normal(ks[5], (3, 3, hidden, latent_dim),
                                      jnp.float32)
                    / jnp.sqrt(9.0 * hidden))
    p["conv2_b"] = jnp.zeros((latent_dim,), jnp.float32)
    return p


# ----------------------------------------------------------------------------
# Condition path (batched matvecs in the wrapper — off the kernel crit path).
# ----------------------------------------------------------------------------
def compute_condition(p, c):
    def silu(v):
        return v * jax.nn.sigmoid(v)
    # condition_embed: Linear -> SiLU -> Linear   (matches nn.Sequential)
    h1 = silu(c @ p["ce_w1"] + p["ce_b1"][None])
    c2 = h1 @ p["ce_w2"] + p["ce_b2"][None]
    # TODO(synk): Unet/UnetV2 not provided; FiLM-style cond projection stand-in.
    return silu(c2 @ p["cproj_w"] + p["cproj_b"][None])            # (B, hidden)


# ----------------------------------------------------------------------------
# Pure-JAX reference for the conv path (explicit pad + im2col, same bf16
# operand / f32 accumulate math) used to validate the fused kernel.
# ----------------------------------------------------------------------------
def _reference_conv(cond, x_nchw, p):
    B, C, H, W = x_nchw.shape
    bf16, f32 = jnp.bfloat16, jnp.float32
    hidden = p["conv1_w"].shape[3]

    def silu(v):
        return v * jax.nn.sigmoid(v)

    def dot(a, b):
        return jnp.dot(a.astype(bf16), b.astype(bf16),
                       preferred_element_type=f32)

    def im2col(x_nhwc):
        Bh, Hh, Wh, Ch = x_nhwc.shape
        xp = jnp.pad(x_nhwc, ((0, 0), (1, 1), (1, 1), (0, 0)))
        cols = [xp[:, di:di + Hh, dj:dj + Wh, :]
                for di in range(3) for dj in range(3)]
        return jnp.concatenate(cols, axis=-1).reshape(Bh * Hh * Wh, 9 * Ch)

    x_nhwc = jnp.transpose(x_nchw, (0, 2, 3, 1))
    a1 = (dot(im2col(x_nhwc), p["conv1_w"].reshape(9 * C, hidden))
          + p["conv1_b"][None] + jnp.repeat(cond, H * W, axis=0))
    h = silu(a1)
    y = (dot(im2col(h.reshape(B, H, W, hidden)),
             p["conv2_w"].reshape(9 * hidden, C)) + p["conv2_b"][None])
    return jnp.transpose(y.reshape(B, H, W, C), (0, 3, 1, 2))


# ----------------------------------------------------------------------------
# LatentDiffusion.forward
# ----------------------------------------------------------------------------
def latent_diffusion_forward(params, x_nchw, cls, t, *, cls_mask_ratio=0.0,
                             mask_key=None, max_train_steps=1000,
                             use_pallas=True):
    B = x_nchw.shape[0]
    embed_dim = params["ce_w2"].shape[1]

    t_emb = time_embed(t, embed_dim, max_train_steps)
    if t_emb.ndim == 1:                       # t.repeat((x.shape[0], 1))
        t_emb = jnp.tile(t_emb[None], (B, 1))
    cls_emb = params["class_table"][cls]
    if cls_emb.ndim == 1:
        cls_emb = jnp.tile(cls_emb[None], (B, 1))
    if cls_mask_ratio > 0:
        u = jax.random.uniform(mask_key, (cls_emb.shape[0],))
        cls_emb = jnp.where((u < cls_mask_ratio)[:, None], 0.0, cls_emb)

    # c = cat((t, cls), dim=1);  c = condition_embed(c);  z_pred = unet(x, c)
    c = jnp.concatenate([t_emb, cls_emb], axis=1)                   # (B, Dc)
    cond = compute_condition(params, c)                             # (B, hid)
    if use_pallas:
        return _fused_unet_call(cond, x_nchw, params)
    return _reference_conv(cond, x_nchw, params)


# ----------------------------------------------------------------------------
if __name__ == "__main__":
    key = jax.random.PRNGKey(0)
    B, latent_dim, latent_size = 2, 4, 16        # ae_config latent_dim / size
    embed_dim = 32                               # unet_config c_dim
    hidden = 32
    n_classes = 10                               # data_config n_classes
    class_embed_dim = min(n_classes, embed_dim)
    max_train_steps = 1000

    kparam, kx, kc, kt = jax.random.split(key, 4)
    params = init_params(kparam, latent_dim=latent_dim, hidden=hidden,
                         embed_dim=embed_dim,
                         class_embed_dim=class_embed_dim,
                         n_classes=n_classes)
    # One-time weight packing (outside any sampling / training step loop) so
    # no transposes / bf16 casts are traced inside the per-step forward.
    params = prepare_kernel_params(params)

    x = jax.random.normal(kx, (B, latent_dim, latent_size, latent_size),
                          jnp.float32)
    cls = jax.random.randint(kc, (B,), 0, n_classes)
    t = jax.random.randint(kt, (B,), 1, max_train_steps + 1)

    fwd = jax.jit(functools.partial(latent_diffusion_forward,
                                    max_train_steps=max_train_steps))
    ref = jax.jit(functools.partial(latent_diffusion_forward,
                                    max_train_steps=max_train_steps,
                                    use_pallas=False))

    out = fwd(params, x, cls, t)
    jax.block_until_ready(out)
    expect = ref(params, x, cls, t)
    jax.block_until_ready(expect)

    assert out.shape == x.shape and out.dtype == jnp.float32
    assert jnp.allclose(out, expect, atol=2e-2, rtol=2e-2), (
        "max abs diff vs reference: %f"
        % float(jnp.max(jnp.abs(out - expect))))
    print("KERNEL_OK")
</pallas_src>

<mosaic_0001>
module attributes {stable_mosaic.version = 11 : i64} {
  func.func @_fused_ldm_kernel(%arg0: i32, %arg1: memref<2x256xi32, #tpu.memory_space<vmem>>, %arg2: memref<2x8x256xf32, #tpu.memory_space<vmem>>, %arg3: memref<32x72xbf16, #tpu.memory_space<vmem>>, %arg4: memref<4x288xbf16, #tpu.memory_space<vmem>>, %arg5: memref<36x2xf32, #tpu.memory_space<vmem>>, %arg6: memref<2x4x256xf32, #tpu.memory_space<vmem>>) attributes {dimension_semantics = [#tpu.dimension_semantics<arbitrary>], iteration_bounds = array<i64: 1>, scalar_prefetch = 0 : i64, scratch_operands = 0 : i64, tpu.core_type = #tpu.core_type<tc>, window_params = [{pipeline_mode = #tpu.pipeline_mode<synchronous>, transform_indices = @transform_0, window_bounds = array<i64: 2, 256>}, {pipeline_mode = #tpu.pipeline_mode<synchronous>, transform_indices = @transform_1, window_bounds = array<i64: 2, 8, 256>}, {pipeline_mode = #tpu.pipeline_mode<synchronous>, transform_indices = @transform_2, window_bounds = array<i64: 32, 72>}, {pipeline_mode = #tpu.pipeline_mode<synchronous>, transform_indices = @transform_3, window_bounds = array<i64: 4, 288>}, {pipeline_mode = #tpu.pipeline_mode<synchronous>, transform_indices = @transform_4, window_bounds = array<i64: 36, 2>}, {pipeline_mode = #tpu.pipeline_mode<synchronous>, transform_indices = @transform_5, window_bounds = array<i64: 2, 4, 256>}]} {
    %c0 = arith.constant 0 : index
    %c0_0 = arith.constant 0 : index
    %0 = vector.load %arg1[%c0, %c0_0] : memref<2x256xi32, #tpu.memory_space<vmem>>, vector<1x256xi32>
    %c1 = arith.constant 1 : index
    %c0_1 = arith.constant 0 : index
    %1 = vector.load %arg1[%c1, %c0_1] : memref<2x256xi32, #tpu.memory_space<vmem>>, vector<1x256xi32>
    %c1_i32 = arith.constant 1 : i32
    %2 = vector.broadcast %c1_i32 : i32 to vector<1x256xi32>
    %3 = arith.cmpi sge, %0, %2 : vector<1x256xi32>
    %c15_i32 = arith.constant 15 : i32
    %4 = vector.broadcast %c15_i32 : i32 to vector<1x256xi32>
    %5 = arith.cmpi slt, %0, %4 : vector<1x256xi32>
    %c1_i32_2 = arith.constant 1 : i32
    %6 = vector.broadcast %c1_i32_2 : i32 to vector<1x256xi32>
    %7 = arith.cmpi sge, %1, %6 : vector<1x256xi32>
    %c15_i32_3 = arith.constant 15 : i32
    %8 = vector.broadcast %c15_i32_3 : i32 to vector<1x256xi32>
    %9 = arith.cmpi slt, %1, %8 : vector<1x256xi32>
    %c0_4 = arith.constant 0 : index
    %c0_5 = arith.constant 0 : index
    %c0_6 = arith.constant 0 : index
    %10 = vector.load %arg2[%c0_4, %c0_5, %c0_6] : memref<2x8x256xf32, #tpu.memory_space<vmem>>, vector<1x8x256xf32>
    %11 = vector.shape_cast %10 : vector<1x8x256xf32> to vector<8x256xf32>
    %c17_i32 = arith.constant 17 : i32
    %12 = tpu.dynamic_rotate %11 by %c17_i32 dim 1 : vector<8x256xf32>, i32 -> vector<8x256xf32>
    %13 = arith.andi %3, %7 : vector<1x256xi1>
    %cst = arith.constant 0.000000e+00 : f32
    %14 = vector.shape_cast %13 : vector<1x256xi1> to vector<1x256xi1>
    %15 = vector.broadcast %14 : vector<1x256xi1> to vector<8x256xi1>
    %16 = vector.broadcast %cst : f32 to vector<8x256xf32>
    %17 = arith.select %15, %12, %16 : vector<8x256xi1>, vector<8x256xf32>
    %c16_i32 = arith.constant 16 : i32
    %18 = tpu.dynamic_rotate %11 by %c16_i32 dim 1 : vector<8x256xf32>, i32 -> vector<8x256xf32>
    %cst_7 = arith.constant 0.000000e+00 : f32
    %19 = vector.shape_cast %3 : vector<1x256xi1> to vector<1x256xi1>
    %20 = vector.broadcast %19 : vector<1x256xi1> to vector<8x256xi1>
    %21 = vector.broadcast %cst_7 : f32 to vector<8x256xf32>
    %22 = arith.select %20, %18, %21 : vector<8x256xi1>, vector<8x256xf32>
    %c15_i32_8 = arith.constant 15 : i32
    %23 = tpu.dynamic_rotate %11 by %c15_i32_8 dim 1 : vector<8x256xf32>, i32 -> vector<8x256xf32>
    %24 = arith.andi %3, %9 : vector<1x256xi1>
    %cst_9 = arith.constant 0.000000e+00 : f32
    %25 = vector.shape_cast %24 : vector<1x256xi1> to vector<1x256xi1>
    %26 = vector.broadcast %25 : vector<1x256xi1> to vector<8x256xi1>
    %27 = vector.broadcast %cst_9 : f32 to vector<8x256xf32>
    %28 = arith.select %26, %23, %27 : vector<8x256xi1>, vector<8x256xf32>
    %c1_i32_10 = arith.constant 1 : i32
    %29 = tpu.dynamic_rotate %11 by %c1_i32_10 dim 1 : vector<8x256xf32>, i32 -> vector<8x256xf32>
    %cst_11 = arith.constant 0.000000e+00 : f32
    %30 = vector.shape_cast %7 : vector<1x256xi1> to vector<1x256xi1>
    %31 = vector.broadcast %30 : vector<1x256xi1> to vector<8x256xi1>
    %32 = vector.broadcast %cst_11 : f32 to vector<8x256xf32>
    %33 = arith.select %31, %29, %32 : vector<8x256xi1>, vector<8x256xf32>
    %c255_i32 = arith.constant 255 : i32
    %34 = tpu.dynamic_rotate %11 by %c255_i32 dim 1 : vector<8x256xf32>, i32 -> vector<8x256xf32>
    %cst_12 = arith.constant 0.000000e+00 : f32
    %35 = vector.shape_cast %9 : vector<1x256xi1> to vector<1x256xi1>
    %36 = vector.broadcast %35 : vector<1x256xi1> to vector<8x256xi1>
    %37 = vector.broadcast %cst_12 : f32 to vector<8x256xf32>
    %38 = arith.select %36, %34, %37 : vector<8x256xi1>, vector<8x256xf32>
    %c241_i32 = arith.constant 241 : i32
    %39 = tpu.dynamic_rotate %11 by %c241_i32 dim 1 : vector<8x256xf32>, i32 -> vector<8x256xf32>
    %40 = arith.andi %5, %7 : vector<1x256xi1>
    %cst_13 = arith.constant 0.000000e+00 : f32
    %41 = vector.shape_cast %40 : vector<1x256xi1> to vector<1x256xi1>
    %42 = vector.broadcast %41 : vector<1x256xi1> to vector<8x256xi1>
    %43 = vector.broadcast %cst_13 : f32 to vector<8x256xf32>
    %44 = arith.select %42, %39, %43 : vector<8x256xi1>, vector<8x256xf32>
    %c240_i32 = arith.constant 240 : i32
    %45 = tpu.dynamic_rotate %11 by %c240_i32 dim 1 : vector<8x256xf32>, i32 -> vector<8x256xf32>
    %cst_14 = arith.constant 0.000000e+00 : f32
    %46 = vector.shape_cast %5 : vector<1x256xi1> to vector<1x256xi1>
    %47 = vector.broadcast %46 : vector<1x256xi1> to vector<8x256xi1>
    %48 = vector.broadcast %cst_14 : f32 to vector<8x256xf32>
    %49 = arith.select %47, %45, %48 : vector<8x256xi1>, vector<8x256xf32>
    %c239_i32 = arith.constant 239 : i32
    %50 = tpu.dynamic_rotate %11 by %c239_i32 dim 1 : vector<8x256xf32>, i32 -> vector<8x256xf32>
    %51 = arith.andi %5, %9 : vector<1x256xi1>
    %cst_15 = arith.constant 0.000000e+00 : f32
    %52 = vector.shape_cast %51 : vector<1x256xi1> to vector<1x256xi1>
    %53 = vector.broadcast %52 : vector<1x256xi1> to vector<8x256xi1>
    %54 = vector.broadcast %cst_15 : f32 to vector<8x256xf32>
    %55 = arith.select %53, %50, %54 : vector<8x256xi1>, vector<8x256xf32>
    %56 = tpu.concatenate %17, %22, %28, %33, %11, %38, %44, %49, %55 in 0 : vector<8x256xf32>, vector<8x256xf32>, vector<8x256xf32>, vector<8x256xf32>, vector<8x256xf32>, vector<8x256xf32>, vector<8x256xf32>, vector<8x256xf32>, vector<8x256xf32> -> vector<72x256xf32>
    %57 = arith.truncf %56 : vector<72x256xf32> to vector<72x256xbf16>
    %c0_16 = arith.constant 0 : index
    %c0_17 = arith.constant 0 : index
    %58 = vector.load %arg3[%c0_16, %c0_17] : memref<32x72xbf16, #tpu.memory_space<vmem>>, vector<32x72xbf16>
    %cst_18 = arith.constant dense<0.000000e+00> : vector<32x256xf32>
    %59 = tpu.matmul %58, %57, %cst_18 {dimension_numbers = #tpu.dot_dimension_numbers<[1], [0], [0], [1], [0, 0, 1, 1], [], []>} : vector<32x72xbf16>, vector<72x256xbf16>, vector<32x256xf32> -> vector<32x256xf32>
    %c0_19 = arith.constant 0 : index
    %c0_20 = arith.constant 0 : index
    %60 = vector.load %arg5[%c0_19, %c0_20] : memref<36x2xf32, #tpu.memory_space<vmem>>, vector<32x1xf32>
    %61 = vector.broadcast %60 : vector<32x1xf32> to vector<32x256xf32>
    %62 = arith.addf %59, %61 : vector<32x256xf32>
    %63 = arith.negf %62 : vector<32x256xf32>
    %64 = math.exp %63 : vector<32x256xf32>
    %cst_21 = arith.constant 1.000000e+00 : f32
    %65 = vector.broadcast %cst_21 : f32 to vector<32x256xf32>
    %66 = arith.addf %65, %64 : vector<32x256xf32>
    %67 = arith.divf %65, %66 : vector<32x256xf32>
    %68 = arith.mulf %62, %67 : vector<32x256xf32>
    %c17_i32_22 = arith.constant 17 : i32
    %69 = tpu.dynamic_rotate %68 by %c17_i32_22 dim 1 : vector<32x256xf32>, i32 -> vector<32x256xf32>
    %70 = arith.andi %3, %7 : vector<1x256xi1>
    %cst_23 = arith.constant 0.000000e+00 : f32
    %71 = vector.shape_cast %70 : vector<1x256xi1> to vector<1x256xi1>
    %72 = vector.broadcast %71 : vector<1x256xi1> to vector<32x256xi1>
    %73 = vector.broadcast %cst_23 : f32 to vector<32x256xf32>
    %74 = arith.select %72, %69, %73 : vector<32x256xi1>, vector<32x256xf32>
    %c16_i32_24 = arith.constant 16 : i32
    %75 = tpu.dynamic_rotate %68 by %c16_i32_24 dim 1 : vector<32x256xf32>, i32 -> vector<32x256xf32>
    %cst_25 = arith.constant 0.000000e+00 : f32
    %76 = vector.shape_cast %3 : vector<1x256xi1> to vector<1x256xi1>
    %77 = vector.broadcast %76 : vector<1x256xi1> to vector<32x256xi1>
    %78 = vector.broadcast %cst_25 : f32 to vector<32x256xf32>
    %79 = arith.select %77, %75, %78 : vector<32x256xi1>, vector<32x256xf32>
    %c15_i32_26 = arith.constant 15 : i32
    %80 = tpu.dynamic_rotate %68 by %c15_i32_26 dim 1 : vector<32x256xf32>, i32 -> vector<32x256xf32>
    %81 = arith.andi %3, %9 : vector<1x256xi1>
    %cst_27 = arith.constant 0.000000e+00 : f32
    %82 = vector.shape_cast %81 : vector<1x256xi1> to vector<1x256xi1>
    %83 = vector.broadcast %82 : vector<1x256xi1> to vector<32x256xi1>
    %84 = vector.broadcast %cst_27 : f32 to vector<32x256xf32>
    %85 = arith.select %83, %80, %84 : vector<32x256xi1>, vector<32x256xf32>
    %c1_i32_28 = arith.constant 1 : i32
    %86 = tpu.dynamic_rotate %68 by %c1_i32_28 dim 1 : vector<32x256xf32>, i32 -> vector<32x256xf32>
    %cst_29 = arith.constant 0.000000e+00 : f32
    %87 = vector.shape_cast %7 : vector<1x256xi1> to vector<1x256xi1>
    %88 = vector.broadcast %87 : vector<1x256xi1> to vector<32x256xi1>
    %89 = vector.broadcast %cst_29 : f32 to vector<32x256xf32>
    %90 = arith.select %88, %86, %89 : vector<32x256xi1>, vector<32x256xf32>
    %c255_i32_30 = arith.constant 255 : i32
    %91 = tpu.dynamic_rotate %68 by %c255_i32_30 dim 1 : vector<32x256xf32>, i32 -> vector<32x256xf32>
    %cst_31 = arith.constant 0.000000e+00 : f32
    %92 = vector.shape_cast %9 : vector<1x256xi1> to vector<1x256xi1>
    %93 = vector.broadcast %92 : vector<1x256xi1> to vector<32x256xi1>
    %94 = vector.broadcast %cst_31 : f32 to vector<32x256xf32>
    %95 = arith.select %93, %91, %94 : vector<32x256xi1>, vector<32x256xf32>
    %c241_i32_32 = arith.constant 241 : i32
    %96 = tpu.dynamic_rotate %68 by %c241_i32_32 dim 1 : vector<32x256xf32>, i32 -> vector<32x256xf32>
    %97 = arith.andi %5, %7 : vector<1x256xi1>
    %cst_33 = arith.constant 0.000000e+00 : f32
    %98 = vector.shape_cast %97 : vector<1x256xi1> to vector<1x256xi1>
    %99 = vector.broadcast %98 : vector<1x256xi1> to vector<32x256xi1>
    %100 = vector.broadcast %cst_33 : f32 to vector<32x256xf32>
    %101 = arith.select %99, %96, %100 : vector<32x256xi1>, vector<32x256xf32>
    %c240_i32_34 = arith.constant 240 : i32
    %102 = tpu.dynamic_rotate %68 by %c240_i32_34 dim 1 : vector<32x256xf32>, i32 -> vector<32x256xf32>
    %cst_35 = arith.constant 0.000000e+00 : f32
    %103 = vector.shape_cast %5 : vector<1x256xi1> to vector<1x256xi1>
    %104 = vector.broadcast %103 : vector<1x256xi1> to vector<32x256xi1>
    %105 = vector.broadcast %cst_35 : f32 to vector<32x256xf32>
    %106 = arith.select %104, %102, %105 : vector<32x256xi1>, vector<32x256xf32>
    %c239_i32_36 = arith.constant 239 : i32
    %107 = tpu.dynamic_rotate %68 by %c239_i32_36 dim 1 : vector<32x256xf32>, i32 -> vector<32x256xf32>
    %108 = arith.andi %5, %9 : vector<1x256xi1>
    %cst_37 = arith.constant 0.000000e+00 : f32
    %109 = vector.shape_cast %108 : vector<1x256xi1> to vector<1x256xi1>
    %110 = vector.broadcast %109 : vector<1x256xi1> to vector<32x256xi1>
    %111 = vector.broadcast %cst_37 : f32 to vector<32x256xf32>
    %112 = arith.select %110, %107, %111 : vector<32x256xi1>, vector<32x256xf32>
    %113 = tpu.concatenate %74, %79, %85, %90, %68, %95, %101, %106, %112 in 0 : vector<32x256xf32>, vector<32x256xf32>, vector<32x256xf32>, vector<32x256xf32>, vector<32x256xf32>, vector<32x256xf32>, vector<32x256xf32>, vector<32x256xf32>, vector<32x256xf32> -> vector<288x256xf32>
    %114 = arith.truncf %113 : vector<288x256xf32> to vector<288x256xbf16>
    %c0_38 = arith.constant 0 : index
    %c0_39 = arith.constant 0 : index
    %115 = vector.load %arg4[%c0_38, %c0_39] : memref<4x288xbf16, #tpu.memory_space<vmem>>, vector<4x256xbf16>
    %116 = vector.extract_strided_slice %114 {offsets = [0, 0], sizes = [256, 256], strides = [1, 1]} : vector<288x256xbf16> to vector<256x256xbf16>
    %cst_40 = arith.constant dense<0.000000e+00> : vector<4x256xf32>
    %117 = tpu.matmul %115, %116, %cst_40 {dimension_numbers = #tpu.dot_dimension_numbers<[1], [0], [0], [1], [0, 0, 1, 1], [], []>} : vector<4x256xbf16>, vector<256x256xbf16>, vector<4x256xf32> -> vector<4x256xf32>
    %c0_41 = arith.constant 0 : index
    %c256 = arith.constant 256 : index
    %118 = vector.load %arg4[%c0_41, %c256] : memref<4x288xbf16, #tpu.memory_space<vmem>>, vector<4x32xbf16>
    %119 = vector.extract_strided_slice %114 {offsets = [256, 0], sizes = [32, 256], strides = [1, 1]} : vector<288x256xbf16> to vector<32x256xbf16>
    %cst_42 = arith.constant dense<0.000000e+00> : vector<4x256xf32>
    %120 = tpu.matmul %118, %119, %cst_42 {dimension_numbers = #tpu.dot_dimension_numbers<[1], [0], [0], [1], [0, 0, 1, 1], [], []>} : vector<4x32xbf16>, vector<32x256xbf16>, vector<4x256xf32> -> vector<4x256xf32>
    %121 = arith.addf %117, %120 : vector<4x256xf32>
    %c32 = arith.constant 32 : index
    %c0_43 = arith.constant 0 : index
    %122 = vector.load %arg5[%c32, %c0_43] : memref<36x2xf32, #tpu.memory_space<vmem>>, vector<4x1xf32>
    %123 = vector.broadcast %122 : vector<4x1xf32> to vector<4x256xf32>
    %124 = arith.addf %121, %123 : vector<4x256xf32>
    %c0_44 = arith.constant 0 : index
    %c0_45 = arith.constant 0 : index
    %c0_46 = arith.constant 0 : index
    %125 = vector.load %arg6[%c0_44, %c0_45, %c0_46] : memref<2x4x256xf32, #tpu.memory_space<vmem>>, vector<1x4x256xf32>
    %126 = vector.shape_cast %125 : vector<1x4x256xf32> to vector<4x256xf32>
    %127 = vector.shape_cast %124 : vector<4x256xf32> to vector<1x4x256xf32>
    tpu.vector_store %arg6[%c0_44, %c0_45, %c0_46], %127 {strides = array<i32>} : memref<2x4x256xf32, #tpu.memory_space<vmem>>, vector<1x4x256xf32>,
    %c1_47 = arith.constant 1 : index
    %c0_48 = arith.constant 0 : index
    %c0_49 = arith.constant 0 : index
    %128 = vector.load %arg2[%c1_47, %c0_48, %c0_49] : memref<2x8x256xf32, #tpu.memory_space<vmem>>, vector<1x8x256xf32>
    %129 = vector.shape_cast %128 : vector<1x8x256xf32> to vector<8x256xf32>
    %c17_i32_50 = arith.constant 17 : i32
    %130 = tpu.dynamic_rotate %129 by %c17_i32_50 dim 1 : vector<8x256xf32>, i32 -> vector<8x256xf32>
    %131 = arith.andi %3, %7 : vector<1x256xi1>
    %cst_51 = arith.constant 0.000000e+00 : f32
    %132 = vector.shape_cast %131 : vector<1x256xi1> to vector<1x256xi1>
    %133 = vector.broadcast %132 : vector<1x256xi1> to vector<8x256xi1>
    %134 = vector.broadcast %cst_51 : f32 to vector<8x256xf32>
    %135 = arith.select %133, %130, %134 : vector<8x256xi1>, vector<8x256xf32>
    %c16_i32_52 = arith.constant 16 : i32
    %136 = tpu.dynamic_rotate %129 by %c16_i32_52 dim 1 : vector<8x256xf32>, i32 -> vector<8x256xf32>
    %cst_53 = arith.constant 0.000000e+00 : f32
    %137 = vector.shape_cast %3 : vector<1x256xi1> to vector<1x256xi1>
    %138 = vector.broadcast %137 : vector<1x256xi1> to vector<8x256xi1>
    %139 = vector.broadcast %cst_53 : f32 to vector<8x256xf32>
    %140 = arith.select %138, %136, %139 : vector<8x256xi1>, vector<8x256xf32>
    %c15_i32_54 = arith.constant 15 : i32
    %141 = tpu.dynamic_rotate %129 by %c15_i32_54 dim 1 : vector<8x256xf32>, i32 -> vector<8x256xf32>
    %142 = arith.andi %3, %9 : vector<1x256xi1>
    %cst_55 = arith.constant 0.000000e+00 : f32
    %143 = vector.shape_cast %142 : vector<1x256xi1> to vector<1x256xi1>
    %144 = vector.broadcast %143 : vector<1x256xi1> to vector<8x256xi1>
    %145 = vector.broadcast %cst_55 : f32 to vector<8x256xf32>
    %146 = arith.select %144, %141, %145 : vector<8x256xi1>, vector<8x256xf32>
    %c1_i32_56 = arith.constant 1 : i32
    %147 = tpu.dynamic_rotate %129 by %c1_i32_56 dim 1 : vector<8x256xf32>, i32 -> vector<8x256xf32>
    %cst_57 = arith.constant 0.000000e+00 : f32
    %148 = vector.shape_cast %7 : vector<1x256xi1> to vector<1x256xi1>
    %149 = vector.broadcast %148 : vector<1x256xi1> to vector<8x256xi1>
    %150 = vector.broadcast %cst_57 : f32 to vector<8x256xf32>
    %151 = arith.select %149, %147, %150 : vector<8x256xi1>, vector<8x256xf32>
    %c255_i32_58 = arith.constant 255 : i32
    %152 = tpu.dynamic_rotate %129 by %c255_i32_58 dim 1 : vector<8x256xf32>, i32 -> vector<8x256xf32>
    %cst_59 = arith.constant 0.000000e+00 : f32
    %153 = vector.shape_cast %9 : vector<1x256xi1> to vector<1x256xi1>
    %154 = vector.broadcast %153 : vector<1x256xi1> to vector<8x256xi1>
    %155 = vector.broadcast %cst_59 : f32 to vector<8x256xf32>
    %156 = arith.select %154, %152, %155 : vector<8x256xi1>, vector<8x256xf32>
    %c241_i32_60 = arith.constant 241 : i32
    %157 = tpu.dynamic_rotate %129 by %c241_i32_60 dim 1 : vector<8x256xf32>, i32 -> vector<8x256xf32>
    %158 = arith.andi %5, %7 : vector<1x256xi1>
    %cst_61 = arith.constant 0.000000e+00 : f32
    %159 = vector.shape_cast %158 : vector<1x256xi1> to vector<1x256xi1>
    %160 = vector.broadcast %159 : vector<1x256xi1> to vector<8x256xi1>
    %161 = vector.broadcast %cst_61 : f32 to vector<8x256xf32>
    %162 = arith.select %160, %157, %161 : vector<8x256xi1>, vector<8x256xf32>
    %c240_i32_62 = arith.constant 240 : i32
    %163 = tpu.dynamic_rotate %129 by %c240_i32_62 dim 1 : vector<8x256xf32>, i32 -> vector<8x256xf32>
    %cst_63 = arith.constant 0.000000e+00 : f32
    %164 = vector.shape_cast %5 : vector<1x256xi1> to vector<1x256xi1>
    %165 = vector.broadcast %164 : vector<1x256xi1> to vector<8x256xi1>
    %166 = vector.broadcast %cst_63 : f32 to vector<8x256xf32>
    %167 = arith.select %165, %163, %166 : vector<8x256xi1>, vector<8x256xf32>
    %c239_i32_64 = arith.constant 239 : i32
    %168 = tpu.dynamic_rotate %129 by %c239_i32_64 dim 1 : vector<8x256xf32>, i32 -> vector<8x256xf32>
    %169 = arith.andi %5, %9 : vector<1x256xi1>
    %cst_65 = arith.constant 0.000000e+00 : f32
    %170 = vector.shape_cast %169 : vector<1x256xi1> to vector<1x256xi1>
    %171 = vector.broadcast %170 : vector<1x256xi1> to vector<8x256xi1>
    %172 = vector.broadcast %cst_65 : f32 to vector<8x256xf32>
    %173 = arith.select %171, %168, %172 : vector<8x256xi1>, vector<8x256xf32>
    %174 = tpu.concatenate %135, %140, %146, %151, %129, %156, %162, %167, %173 in 0 : vector<8x256xf32>, vector<8x256xf32>, vector<8x256xf32>, vector<8x256xf32>, vector<8x256xf32>, vector<8x256xf32>, vector<8x256xf32>, vector<8x256xf32>, vector<8x256xf32> -> vector<72x256xf32>
    %175 = arith.truncf %174 : vector<72x256xf32> to vector<72x256xbf16>
    %c0_66 = arith.constant 0 : index
    %c0_67 = arith.constant 0 : index
    %176 = vector.load %arg3[%c0_66, %c0_67] : memref<32x72xbf16, #tpu.memory_space<vmem>>, vector<32x72xbf16>
    %cst_68 = arith.constant dense<0.000000e+00> : vector<32x256xf32>
    %177 = tpu.matmul %176, %175, %cst_68 {dimension_numbers = #tpu.dot_dimension_numbers<[1], [0], [0], [1], [0, 0, 1, 1], [], []>} : vector<32x72xbf16>, vector<72x256xbf16>, vector<32x256xf32> -> vector<32x256xf32>
    %c0_69 = arith.constant 0 : index
    %c1_70 = arith.constant 1 : index
    %178 = vector.load %arg5[%c0_69, %c1_70] : memref<36x2xf32, #tpu.memory_space<vmem>>, vector<32x1xf32>
    %179 = vector.broadcast %178 : vector<32x1xf32> to vector<32x256xf32>
    %180 = arith.addf %177, %179 : vector<32x256xf32>
    %181 = arith.negf %180 : vector<32x256xf32>
    %182 = math.exp %181 : vector<32x256xf32>
    %cst_71 = arith.constant 1.000000e+00 : f32
    %183 = vector.broadcast %cst_71 : f32 to vector<32x256xf32>
    %184 = arith.addf %183, %182 : vector<32x256xf32>
    %185 = arith.divf %183, %184 : vector<32x256xf32>
    %186 = arith.mulf %180, %185 : vector<32x256xf32>
    %c17_i32_72 = arith.constant 17 : i32
    %187 = tpu.dynamic_rotate %186 by %c17_i32_72 dim 1 : vector<32x256xf32>, i32 -> vector<32x256xf32>
    %188 = arith.andi %3, %7 : vector<1x256xi1>
    %cst_73 = arith.constant 0.000000e+00 : f32
    %189 = vector.shape_cast %188 : vector<1x256xi1> to vector<1x256xi1>
    %190 = vector.broadcast %189 : vector<1x256xi1> to vector<32x256xi1>
    %191 = vector.broadcast %cst_73 : f32 to vector<32x256xf32>
    %192 = arith.select %190, %187, %191 : vector<32x256xi1>, vector<32x256xf32>
    %c16_i32_74 = arith.constant 16 : i32
    %193 = tpu.dynamic_rotate %186 by %c16_i32_74 dim 1 : vector<32x256xf32>, i32 -> vector<32x256xf32>
    %cst_75 = arith.constant 0.000000e+00 : f32
    %194 = vector.shape_cast %3 : vector<1x256xi1> to vector<1x256xi1>
    %195 = vector.broadcast %194 : vector<1x256xi1> to vector<32x256xi1>
    %196 = vector.broadcast %cst_75 : f32 to vector<32x256xf32>
    %197 = arith.select %195, %193, %196 : vector<32x256xi1>, vector<32x256xf32>
    %c15_i32_76 = arith.constant 15 : i32
    %198 = tpu.dynamic_rotate %186 by %c15_i32_76 dim 1 : vector<32x256xf32>, i32 -> vector<32x256xf32>
    %199 = arith.andi %3, %9 : vector<1x256xi1>
    %cst_77 = arith.constant 0.000000e+00 : f32
    %200 = vector.shape_cast %199 : vector<1x256xi1> to vector<1x256xi1>
    %201 = vector.broadcast %200 : vector<1x256xi1> to vector<32x256xi1>
    %202 = vector.broadcast %cst_77 : f32 to vector<32x256xf32>
    %203 = arith.select %201, %198, %202 : vector<32x256xi1>, vector<32x256xf32>
    %c1_i32_78 = arith.constant 1 : i32
    %204 = tpu.dynamic_rotate %186 by %c1_i32_78 dim 1 : vector<32x256xf32>, i32 -> vector<32x256xf32>
    %cst_79 = arith.constant 0.000000e+00 : f32
    %205 = vector.shape_cast %7 : vector<1x256xi1> to vector<1x256xi1>
    %206 = vector.broadcast %205 : vector<1x256xi1> to vector<32x256xi1>
    %207 = vector.broadcast %cst_79 : f32 to vector<32x256xf32>
    %208 = arith.select %206, %204, %207 : vector<32x256xi1>, vector<32x256xf32>
    %c255_i32_80 = arith.constant 255 : i32
    %209 = tpu.dynamic_rotate %186 by %c255_i32_80 dim 1 : vector<32x256xf32>, i32 -> vector<32x256xf32>
    %cst_81 = arith.constant 0.000000e+00 : f32
    %210 = vector.shape_cast %9 : vector<1x256xi1> to vector<1x256xi1>
    %211 = vector.broadcast %210 : vector<1x256xi1> to vector<32x256xi1>
    %212 = vector.broadcast %cst_81 : f32 to vector<32x256xf32>
    %213 = arith.select %211, %209, %212 : vector<32x256xi1>, vector<32x256xf32>
    %c241_i32_82 = arith.constant 241 : i32
    %214 = tpu.dynamic_rotate %186 by %c241_i32_82 dim 1 : vector<32x256xf32>, i32 -> vector<32x256xf32>
    %215 = arith.andi %5, %7 : vector<1x256xi1>
    %cst_83 = arith.constant 0.000000e+00 : f32
    %216 = vector.shape_cast %215 : vector<1x256xi1> to vector<1x256xi1>
    %217 = vector.broadcast %216 : vector<1x256xi1> to vector<32x256xi1>
    %218 = vector.broadcast %cst_83 : f32 to vector<32x256xf32>
    %219 = arith.select %217, %214, %218 : vector<32x256xi1>, vector<32x256xf32>
    %c240_i32_84 = arith.constant 240 : i32
    %220 = tpu.dynamic_rotate %186 by %c240_i32_84 dim 1 : vector<32x256xf32>, i32 -> vector<32x256xf32>
    %cst_85 = arith.constant 0.000000e+00 : f32
    %221 = vector.shape_cast %5 : vector<1x256xi1> to vector<1x256xi1>
    %222 = vector.broadcast %221 : vector<1x256xi1> to vector<32x256xi1>
    %223 = vector.broadcast %cst_85 : f32 to vector<32x256xf32>
    %224 = arith.select %222, %220, %223 : vector<32x256xi1>, vector<32x256xf32>
    %c239_i32_86 = arith.constant 239 : i32
    %225 = tpu.dynamic_rotate %186 by %c239_i32_86 dim 1 : vector<32x256xf32>, i32 -> vector<32x256xf32>
    %226 = arith.andi %5, %9 : vector<1x256xi1>
    %cst_87 = arith.constant 0.000000e+00 : f32
    %227 = vector.shape_cast %226 : vector<1x256xi1> to vector<1x256xi1>
    %228 = vector.broadcast %227 : vector<1x256xi1> to vector<32x256xi1>
    %229 = vector.broadcast %cst_87 : f32 to vector<32x256xf32>
    %230 = arith.select %228, %225, %229 : vector<32x256xi1>, vector<32x256xf32>
    %231 = tpu.concatenate %192, %197, %203, %208, %186, %213, %219, %224, %230 in 0 : vector<32x256xf32>, vector<32x256xf32>, vector<32x256xf32>, vector<32x256xf32>, vector<32x256xf32>, vector<32x256xf32>, vector<32x256xf32>, vector<32x256xf32>, vector<32x256xf32> -> vector<288x256xf32>
    %232 = arith.truncf %231 : vector<288x256xf32> to vector<288x256xbf16>
    %c0_88 = arith.constant 0 : index
    %c0_89 = arith.constant 0 : index
    %233 = vector.load %arg4[%c0_88, %c0_89] : memref<4x288xbf16, #tpu.memory_space<vmem>>, vector<4x256xbf16>
    %234 = vector.extract_strided_slice %232 {offsets = [0, 0], sizes = [256, 256], strides = [1, 1]} : vector<288x256xbf16> to vector<256x256xbf16>
    %cst_90 = arith.constant dense<0.000000e+00> : vector<4x256xf32>
    %235 = tpu.matmul %233, %234, %cst_90 {dimension_numbers = #tpu.dot_dimension_numbers<[1], [0], [0], [1], [0, 0, 1, 1], [], []>} : vector<4x256xbf16>, vector<256x256xbf16>, vector<4x256xf32> -> vector<4x256xf32>
    %c0_91 = arith.constant 0 : index
    %c256_92 = arith.constant 256 : index
    %236 = vector.load %arg4[%c0_91, %c256_92] : memref<4x288xbf16, #tpu.memory_space<vmem>>, vector<4x32xbf16>
    %237 = vector.extract_strided_slice %232 {offsets = [256, 0], sizes = [32, 256], strides = [1, 1]} : vector<288x256xbf16> to vector<32x256xbf16>
    %cst_93 = arith.constant dense<0.000000e+00> : vector<4x256xf32>
    %238 = tpu.matmul %236, %237, %cst_93 {dimension_numbers = #tpu.dot_dimension_numbers<[1], [0], [0], [1], [0, 0, 1, 1], [], []>} : vector<4x32xbf16>, vector<32x256xbf16>, vector<4x256xf32> -> vector<4x256xf32>
    %239 = arith.addf %235, %238 : vector<4x256xf32>
    %c32_94 = arith.constant 32 : index
    %c1_95 = arith.constant 1 : index
    %240 = vector.load %arg5[%c32_94, %c1_95] : memref<36x2xf32, #tpu.memory_space<vmem>>, vector<4x1xf32>
    %241 = vector.broadcast %240 : vector<4x1xf32> to vector<4x256xf32>
    %242 = arith.addf %239, %241 : vector<4x256xf32>
    %c1_96 = arith.constant 1 : index
    %c0_97 = arith.constant 0 : index
    %c0_98 = arith.constant 0 : index
    %243 = vector.load %arg6[%c1_96, %c0_97, %c0_98] : memref<2x4x256xf32, #tpu.memory_space<vmem>>, vector<1x4x256xf32>
    %244 = vector.shape_cast %243 : vector<1x4x256xf32> to vector<4x256xf32>
    %245 = vector.shape_cast %242 : vector<4x256xf32> to vector<1x4x256xf32>
    tpu.vector_store %arg6[%c1_96, %c0_97, %c0_98], %245 {strides = array<i32>} : memref<2x4x256xf32, #tpu.memory_space<vmem>>, vector<1x4x256xf32>,
    return
  }
  func.func @transform_0(%arg0: i32) -> (i32, i32) {
    %c0_i32 = arith.constant 0 : i32
    %c0_i32_0 = arith.constant 0 : i32
    %c0_i32_1 = arith.constant 0 : i32
    return %c0_i32, %c0_i32_0 : i32, i32
  }
  func.func @transform_1(%arg0: i32) -> (i32, i32, i32) {
    %c0_i32 = arith.constant 0 : i32
    %c0_i32_0 = arith.constant 0 : i32
    %c0_i32_1 = arith.constant 0 : i32
    %c0_i32_2 = arith.constant 0 : i32
    return %c0_i32, %c0_i32_0, %c0_i32_1 : i32, i32, i32
  }
  func.func @transform_2(%arg0: i32) -> (i32, i32) {
    %c0_i32 = arith.constant 0 : i32
    %c0_i32_0 = arith.constant 0 : i32
    %c0_i32_1 = arith.constant 0 : i32
    return %c0_i32, %c0_i32_0 : i32, i32
  }
  func.func @transform_3(%arg0: i32) -> (i32, i32) {
    %c0_i32 = arith.constant 0 : i32
    %c0_i32_0 = arith.constant 0 : i32
    %c0_i32_1 = arith.constant 0 : i32
    return %c0_i32, %c0_i32_0 : i32, i32
  }
  func.func @transform_4(%arg0: i32) -> (i32, i32) {
    %c0_i32 = arith.constant 0 : i32
    %c0_i32_0 = arith.constant 0 : i32
    %c0_i32_1 = arith.constant 0 : i32
    return %c0_i32, %c0_i32_0 : i32, i32
  }
  func.func @transform_5(%arg0: i32) -> (i32, i32, i32) {
    %c0_i32 = arith.constant 0 : i32
    %c0_i32_0 = arith.constant 0 : i32
    %c0_i32_1 = arith.constant 0 : i32
    %c0_i32_2 = arith.constant 0 : i32
    return %c0_i32, %c0_i32_0, %c0_i32_1 : i32, i32, i32
  }
}

</mosaic_0001>

<llo_original>
// kernel: latent_diffusion_forward.1
$region0: #{latent_diffusion_forward.1}
  #allocation0 [shape = 'u32[]', space=smem, size = 0x4, offset = 0x4, fixed_abs, tag = 'smem constant byte address 0x4 - core index']
  #allocation1 [shape = 'u32[144,128]{1,0:T(1,128)}', space=vmem, size = 0x12000, scoped, tag = 'internal scratch']
  %s0 = inlined_call_operand.vmem [shape: s32[2,256], index: 0, kind: input, shape index: {}]
  %s1 = inlined_call_operand.vmem [shape: f32[2,8,256], index: 1, kind: input, shape index: {}]
  %s2 = inlined_call_operand.vmem [shape: bf16[32,72], index: 2, kind: input, shape index: {}]
  %s3 = inlined_call_operand.vmem [shape: bf16[4,288], index: 3, kind: input, shape index: {}]
  %s4 = inlined_call_operand.vmem [shape: f32[36,2], index: 4, kind: input, shape index: {}]
  %s5 = inlined_call_operand.vmem [shape: f32[2,4,256], index: 5, kind: output, shape index: {}]
  %s6 = sld [smem:[#allocation0]]
  $region30: #{latent_diffusion_forward.1} parent=0
    _
  %s8 = ssub.s32 1, %s6
  %s9 = scalar_select 0, %s8, %s6
  // Predicated region
  $region2: #{latent_diffusion_forward.1} parent=0 // pred_check
    _
  $region3: #{latent_diffusion_forward.1} parent=0 // pred_check_branch
    %11 = sbr.rel (0) target = $region5
  $region4: #{latent_diffusion_forward.1} parent=0 // pred_region
    _
  $region5: #{latent_diffusion_forward.1} parent=0 // pred_fallthru
    _
  // Predicated region
  $region6: #{latent_diffusion_forward.1} parent=0 // pred_check
    _
  $region7: #{latent_diffusion_forward.1} parent=0 // pred_check_branch
    %13 = sbr.rel (0) target = $region9
  $region8: #{latent_diffusion_forward.1} parent=0 // pred_region
    _
  $region9: #{latent_diffusion_forward.1} parent=0 // pred_fallthru
    _
  // Predicated region
  $region10: #{latent_diffusion_forward.1} parent=0 // pred_check
    _
  $region11: #{latent_diffusion_forward.1} parent=0 // pred_check_branch
    %15 = sbr.rel (0) target = $region13
  $region12: #{latent_diffusion_forward.1} parent=0 // pred_region
    _
  $region13: #{latent_diffusion_forward.1} parent=0 // pred_fallthru
    _
  // Predicated region
  $region14: #{latent_diffusion_forward.1} parent=0 // pred_check
    _
  $region15: #{latent_diffusion_forward.1} parent=0 // pred_check_branch
    %17 = sbr.rel (0) target = $region17
  $region16: #{latent_diffusion_forward.1} parent=0 // pred_region
    _
  $region17: #{latent_diffusion_forward.1} parent=0 // pred_fallthru
    _
  // Predicated region
  $region18: #{latent_diffusion_forward.1} parent=0 // pred_check
    _
  $region19: #{latent_diffusion_forward.1} parent=0 // pred_check_branch
    %19 = sbr.rel (0) target = $region21
  $region20: #{latent_diffusion_forward.1} parent=0 // pred_region
    _
  $region21: #{latent_diffusion_forward.1} parent=0 // pred_fallthru
    _
  %v21 = vld [vmem:[%s0] ss:$2 sm:$0x3]
  %s22 = scalar_lea.vmem %s0, 1
  %v23 = vld [vmem:[%s22] ss:$2 sm:$0x3]
  %vm24 = vcmp.ge.s32.totalorder %v21, 1
  %vm25 = vcmp.lt.s32.totalorder %v21, 15
  %vm26 = vcmp.ge.s32.totalorder %v23, 1
  %vm27 = vcmp.lt.s32.totalorder %v23, 15
  %v28 = vld [vmem:[%s1] sm:$0xff]
  %v29 = vld [vmem:[%s1 + $0x8] sm:$0xff]
  %30 = vrot.lane.b32.xlu0 %v28, 17
  %v31 = vpop.permute.xlu0 %30
  %32 = vrot.lane.b32.xlu0 %v29, 17
  %v33 = vpop.permute.xlu0 %32
  %v34 = vlaneseq
  %v35 = vand.u32 %v34, 127
  %vm36 = vcmp.lt.s32.totalorder %v35, 17
  %v37 = vsel %vm36, %v31, %v33
  %v38 = vsel %vm36, %v33, %v31
  %vm39 = vmand %vm24, %vm26
  %v40 = vsel %vm39, 1, 0
  %v41 = vlaneseq
  %v42 = vshrl.u32 %v41, 7
  %v43 = vsub.s32 0, %v42
  %v44 = vrot.slane %v40, %v43
  %v45 = vlaneseq
  %v46 = vshrl.u32 %v45, 7
  %v47 = vsub.s32 1, %v46
  %v48 = vrot.slane %v40, %v47
  %vm49 = vcmp.eq.s32.totalorder %v44, 1
  %vm50 = vcmp.eq.s32.totalorder %v48, 1
  %v51 = vsel %vm49, %v38, 0.0
  %v52 = vsel %vm50, %v37, 0.0
  %53 = vrot.lane.b32.xlu0 %v28, 16
  %v54 = vpop.permute.xlu0 %53
  %55 = vrot.lane.b32.xlu0 %v29, 16
  %v56 = vpop.permute.xlu0 %55
  %vm57 = vcmp.lt.s32.totalorder %v35, 16
  %v58 = vsel %vm57, %v54, %v56
  %v59 = vsel %vm57, %v56, %v54
  %v60 = vsel %vm24, 1, 0
  %v61 = vlaneseq
  %v62 = vshrl.u32 %v61, 7
  %v63 = vsub.s32 0, %v62
  %v64 = vrot.slane %v60, %v63
  %v65 = vlaneseq
  %v66 = vshrl.u32 %v65, 7
  %v67 = vsub.s32 1, %v66
  %v68 = vrot.slane %v60, %v67
  %vm69 = vcmp.eq.s32.totalorder %v64, 1
  %vm70 = vcmp.eq.s32.totalorder %v68, 1
  %v71 = vsel %vm69, %v59, 0.0
  %v72 = vsel %vm70, %v58, 0.0
  %73 = vrot.lane.b32.xlu0 %v28, 15
  %v74 = vpop.permute.xlu0 %73
  %75 = vrot.lane.b32.xlu0 %v29, 15
  %v76 = vpop.permute.xlu0 %75
  %vm77 = vcmp.lt.s32.totalorder %v35, 15
  %v78 = vsel %vm77, %v74, %v76
  %v79 = vsel %vm77, %v76, %v74
  %vm80 = vmand %vm24, %vm27
  %v81 = vsel %vm80, 1, 0
  %v82 = vlaneseq
  %v83 = vshrl.u32 %v82, 7
  %v84 = vsub.s32 0, %v83
  %v85 = vrot.slane %v81, %v84
  %v86 = vlaneseq
  %v87 = vshrl.u32 %v86, 7
  %v88 = vsub.s32 1, %v87
  %v89 = vrot.slane %v81, %v88
  %vm90 = vcmp.eq.s32.totalorder %v85, 1
  %vm91 = vcmp.eq.s32.totalorder %v89, 1
  %v92 = vsel %vm90, %v79, 0.0
  %v93 = vsel %vm91, %v78, 0.0
  %94 = vrot.lane.b32.xlu0 %v28, 1
  %v95 = vpop.permute.xlu0 %94
  %96 = vrot.lane.b32.xlu0 %v29, 1
  %v97 = vpop.permute.xlu0 %96
  %vm98 = vcmp.lt.s32.totalorder %v35, 1
  %v99 = vsel %vm98, %v95, %v97
  %v100 = vsel %vm98, %v97, %v95
  %v101 = vsel %vm26, 1, 0
  %v102 = vlaneseq
  %v103 = vshrl.u32 %v102, 7
  %v104 = vsub.s32 0, %v103
  %v105 = vrot.slane %v101, %v104
  %v106 = vlaneseq
  %v107 = vshrl.u32 %v106, 7
  %v108 = vsub.s32 1, %v107
  %v109 = vrot.slane %v101, %v108
  %vm110 = vcmp.eq.s32.totalorder %v105, 1
  %vm111 = vcmp.eq.s32.totalorder %v109, 1
  %v112 = vsel %vm110, %v100, 0.0
  %v113 = vsel %vm111, %v99, 0.0
  %114 = vrot.lane.b32.xlu0 %v28, 127
  %v115 = vpop.permute.xlu0 %114
  %116 = vrot.lane.b32.xlu0 %v29, 127
  %v117 = vpop.permute.xlu0 %116
  %vm118 = vcmp.lt.s32.totalorder %v35, 127
  %v119 = vsel %vm118, %v115, %v117
  %v120 = vsel %vm118, %v117, %v115
  %v121 = vsel %vm27, 1, 0
  %v122 = vlaneseq
  %v123 = vshrl.u32 %v122, 7
  %v124 = vsub.s32 0, %v123
  %v125 = vrot.slane %v121, %v124
  %v126 = vlaneseq
  %v127 = vshrl.u32 %v126, 7
  %v128 = vsub.s32 1, %v127
  %v129 = vrot.slane %v121, %v128
  %vm130 = vcmp.eq.s32.totalorder %v125, 1
  %vm131 = vcmp.eq.s32.totalorder %v129, 1
  %v132 = vsel %vm130, %v119, 0.0
  %v133 = vsel %vm131, %v120, 0.0
  %134 = vrot.lane.b32.xlu0 %v28, 113
  %v135 = vpop.permute.xlu0 %134
  %136 = vrot.lane.b32.xlu0 %v29, 113
  %v137 = vpop.permute.xlu0 %136
  %vm138 = vcmp.lt.s32.totalorder %v35, 113
  %v139 = vsel %vm138, %v135, %v137
  %v140 = vsel %vm138, %v137, %v135
  %vm141 = vmand %vm25, %vm26
  %v142 = vsel %vm141, 1, 0
  %v143 = vlaneseq
  %v144 = vshrl.u32 %v143, 7
  %v145 = vsub.s32 0, %v144
  %v146 = vrot.slane %v142, %v145
  %v147 = vlaneseq
  %v148 = vshrl.u32 %v147, 7
  %v149 = vsub.s32 1, %v148
  %v150 = vrot.slane %v142, %v149
  %vm151 = vcmp.eq.s32.totalorder %v146, 1
  %vm152 = vcmp.eq.s32.totalorder %v150, 1
  %v153 = vsel %vm151, %v139, 0.0
  %v154 = vsel %vm152, %v140, 0.0
  %155 = vrot.lane.b32.xlu0 %v28, 112
  %v156 = vpop.permute.xlu0 %155
  %157 = vrot.lane.b32.xlu0 %v29, 112
  %v158 = vpop.permute.xlu0 %157
  %vm159 = vcmp.lt.s32.totalorder %v35, 112
  %v160 = vsel %vm159, %v156, %v158
  %v161 = vsel %vm159, %v158, %v156
  %v162 = vsel %vm25, 1, 0
  %v163 = vlaneseq
  %v164 = vshrl.u32 %v163, 7
  %v165 = vsub.s32 0, %v164
  %v166 = vrot.slane %v162, %v165
  %v167 = vlaneseq
  %v168 = vshrl.u32 %v167, 7
  %v169 = vsub.s32 1, %v168
  %v170 = vrot.slane %v162, %v169
  %vm171 = vcmp.eq.s32.totalorder %v166, 1
  %vm172 = vcmp.eq.s32.totalorder %v170, 1
  %v173 = vsel %vm171, %v160, 0.0
  %v174 = vsel %vm172, %v161, 0.0
  %175 = vrot.lane.b32.xlu0 %v28, 111
  %v176 = vpop.permute.xlu0 %175
  %177 = vrot.lane.b32.xlu0 %v29, 111
  %v178 = vpop.permute.xlu0 %177
  %vm179 = vcmp.lt.s32.totalorder %v35, 111
  %v180 = vsel %vm179, %v176, %v178
  %v181 = vsel %vm179, %v178, %v176
  %vm182 = vmand %vm25, %vm27
  %v183 = vsel %vm182, 1, 0
  %v184 = vlaneseq
  %v185 = vshrl.u32 %v184, 7
  %v186 = vsub.s32 0, %v185
  %v187 = vrot.slane %v183, %v186
  %v188 = vlaneseq
  %v189 = vshrl.u32 %v188, 7
  %v190 = vsub.s32 1, %v189
  %v191 = vrot.slane %v183, %v190
  %vm192 = vcmp.eq.s32.totalorder %v187, 1
  %vm193 = vcmp.eq.s32.totalorder %v191, 1
  %v194 = vsel %vm192, %v180, 0.0
  %v195 = vsel %vm193, %v181, 0.0
  %v196 = vpack.c.bf16 %v71, %v51
  %v197 = vpack.c.bf16 %v72, %v52
  %v198 = vpack.c.bf16 %v112, %v92
  %v199 = vpack.c.bf16 %v113, %v93
  %v200 = vpack.c.bf16 %v132, %v28
  %v201 = vpack.c.bf16 %v133, %v29
  %v202 = vpack.c.bf16 %v173, %v153
  %v203 = vpack.c.bf16 %v174, %v154
  %v204 = vpack.c.bf16 %v194, %v194
  %v205 = vpack.c.bf16 %v195, %v195
  %v206 = vld [vmem:[%s2] sm:$0xf]
  %v207 = vld [vmem:[%s2 + $0x4] sm:$0xf]
  %v208 = vld [vmem:[%s2 + $0x8] sm:$0xf]
  %v209 = vld [vmem:[%s2 + $0xc] sm:$0xf]
  %v210 = vld [vmem:[%s4] sm:$0xff]
  %v211 = vld [vmem:[%s4 + $0x8] sm:$0xff]
  %v212 = vld [vmem:[%s4 + $0x10] sm:$0xff]
  %v213 = vld [vmem:[%s4 + $0x18] sm:$0xff]
  %215 = vset.pattern.permute.xlu0 0
  %216 = vperm.xlu0 %215, %v210
  %v217 = vpop.permute.xlu0 %216
  %220 = vset.pattern.permute.xlu0 0
  %221 = vperm.xlu0 %220, %v211
  %v222 = vpop.permute.xlu0 %221
  %225 = vset.pattern.permute.xlu0 0
  %226 = vperm.xlu0 %225, %v212
  %v227 = vpop.permute.xlu0 %226
  %230 = vset.pattern.permute.xlu0 0
  %231 = vperm.xlu0 %230, %v213
  %v232 = vpop.permute.xlu0 %231
  %v238 = vunpack.c.l.b16 %v206
  %v239 = vunpack.c.l.b16 %v207
  %v240 = vunpack.c.l.b16 %v208
  %v241 = vunpack.c.l.b16 %v209
  %v242 = vpack.c.b16 %v239, %v238
  %v243 = vpack.c.b16 %v241, %v240
  %vm244 = vcmask 588800
  %v246 = vsel %vm244, %v242, 0
  %v249 = vsel %vm244, %v243, 0
  %vm251 = vcmask 1043456
  %v253 = vsel %vm251, %v204, 0
  %v256 = vsel %vm251, %v205, 0
  %258 = vmatprep.subr.bf16.mxu0 %v197
  %259 = vmatpush1.bf16.msra.mxu0 %v196
  %260 = vmatprep.subr.bf16.mxu0 %v199
  %261 = vmatpush1.bf16.msra.mxu0 %v198
  %262 = vmatprep.subr.bf16.mxu0 %v201
  %263 = vmatpush1.bf16.msra.mxu0 %v200
  %264 = vmatprep.subr.bf16.mxu0 %v203
  %265 = vmatpush1.bf16.msra.mxu0 %v202
  %266 = vmatprep.subr.bf16.mxu0 %v256
  %267 = vmatpush1.bf16.msra.mxu0 %v253
  %268 = vmatprep.subr.bf16.mxu0 0
  %269 = vmatpush1.bf16.msra.mxu0 0
  %270 = vmatprep.subr.bf16.mxu0 0
  %271 = vmatpush1.bf16.msra.mxu0 0
  %272 = vmatprep.subr.bf16.mxu0 0
  %273 = vmatpush1.bf16.msra.mxu0 0
  %274 = vmatprep.subr.bf16.mxu0 0
  %275 = vmatpush1.bf16.msra.mxu0 0
  %276 = vmatprep.subr.bf16.mxu0 0
  %277 = vmatpush1.bf16.msra.mxu0 0
  %278 = vmatprep.subr.bf16.mxu0 0
  %279 = vmatpush1.bf16.msra.mxu0 0
  %280 = vmatprep.subr.bf16.mxu0 0
  %281 = vmatpush1.bf16.msra.mxu0 0
  %282 = vmatprep.subr.bf16.mxu0 0
  %283 = vmatpush1.bf16.msra.mxu0 0
  %284 = vmatprep.subr.bf16.mxu0 0
  %285 = vmatpush1.bf16.msra.mxu0 0
  %286 = vmatprep.subr.bf16.mxu0 0
  %287 = vmatpush1.bf16.msra.mxu0 0
  %288 = vmatprep.subr.bf16.mxu0 0
  %289 = vmatpush1.bf16.msra.mxu0 0
  %290 = vmatprep.mubr.bf16.mxu0 0
  %291 = vmatmul.mubr.bf16.gmra.mrb[0].mxu0 %v246
  %v292 = vpop.f32.mrb[0].mxu0
  %v293 = vadd.f32 %v217, %v292
  %v294 = vpop.f32.mrb[0].mxu0
  %v295 = vadd.f32 %v217, %v294
  %v296 = vpop.f32.mrb[0].mxu0
  %v297 = vadd.f32 %v222, %v296
  %v298 = vpop.f32.mrb[0].mxu0
  %v299 = vadd.f32 %v222, %v298
  %300 = vmatprep.mubr.bf16.mxu0 0
  %301 = vmatmul.mubr.bf16.gmra.mrb[0].mxu0 %v249
  %v302 = vpop.f32.mrb[0].mxu0
  %v303 = vadd.f32 %v227, %v302
  %v304 = vpop.f32.mrb[0].mxu0
  %v305 = vadd.f32 %v227, %v304
  %v306 = vpop.f32.mrb[0].mxu0
  %v307 = vadd.f32 %v232, %v306
  %v308 = vpop.f32.mrb[0].mxu0
  %v309 = vadd.f32 %v232, %v308
  %310 = vdwg.mxu0
  %v311 = vxor.u32 %v293, 2147483648
  %v312 = vxor.u32 %v295, 2147483648
  %v313 = vxor.u32 %v297, 2147483648
  %v314 = vxor.u32 %v299, 2147483648
  %v315 = vxor.u32 %v303, 2147483648
  %v316 = vxor.u32 %v305, 2147483648
  %v317 = vxor.u32 %v307, 2147483648
  %v318 = vxor.u32 %v309, 2147483648
  %v319 = vmul.f32 %v311, 1.442695
  %v320 = vpow.pop %v319
  %v321 = vmul.f32 %v312, 1.442695
  %v322 = vpow.pop %v321
  %v323 = vmul.f32 %v313, 1.442695
  %v324 = vpow.pop %v323
  %v325 = vmul.f32 %v314, 1.442695
  %v326 = vpow.pop %v325
  %v327 = vmul.f32 %v315, 1.442695
  %v328 = vpow.pop %v327
  %v329 = vmul.f32 %v316, 1.442695
  %v330 = vpow.pop %v329
  %v331 = vmul.f32 %v317, 1.442695
  %v332 = vpow.pop %v331
  %v333 = vmul.f32 %v318, 1.442695
  %v334 = vpow.pop %v333
  %v335 = vadd.f32 %v320, 1.0
  %v336 = vadd.f32 %v322, 1.0
  %v337 = vadd.f32 %v324, 1.0
  %v338 = vadd.f32 %v326, 1.0
  %v339 = vadd.f32 %v328, 1.0
  %v340 = vadd.f32 %v330, 1.0
  %v341 = vadd.f32 %v332, 1.0
  %v342 = vadd.f32 %v334, 1.0
  %v343 = vrcp.pop %v335
  %v344 = vmul.f32 1.0, %v343
  %v345 = vrcp.pop %v336
  %v346 = vmul.f32 1.0, %v345
  %v347 = vrcp.pop %v337
  %v348 = vmul.f32 1.0, %v347
  %v349 = vrcp.pop %v338
  %v350 = vmul.f32 1.0, %v349
  %v351 = vrcp.pop %v339
  %v352 = vmul.f32 1.0, %v351
  %v353 = vrcp.pop %v340
  %v354 = vmul.f32 1.0, %v353
  %v355 = vrcp.pop %v341
  %v356 = vmul.f32 1.0, %v355
  %v357 = vrcp.pop %v342
  %v358 = vmul.f32 1.0, %v357
  %v359 = vmul.f32 %v293, %v344
  %v360 = vmul.f32 %v295, %v346
  %v361 = vmul.f32 %v297, %v348
  %v362 = vmul.f32 %v299, %v350
  %v363 = vmul.f32 %v303, %v352
  %v364 = vmul.f32 %v305, %v354
  %v365 = vmul.f32 %v307, %v356
  %v366 = vmul.f32 %v309, %v358
  %367 = vrot.lane.b32.xlu0 %v359, 17
  %v368 = vpop.permute.xlu0 %367
  %369 = vrot.lane.b32.xlu0 %v361, 17
  %v370 = vpop.permute.xlu0 %369
  %371 = vrot.lane.b32.xlu0 %v363, 17
  %v372 = vpop.permute.xlu0 %371
  %373 = vrot.lane.b32.xlu0 %v365, 17
  %v374 = vpop.permute.xlu0 %373
  %375 = vrot.lane.b32.xlu0 %v360, 17
  %v376 = vpop.permute.xlu0 %375
  %377 = vrot.lane.b32.xlu0 %v362, 17
  %v378 = vpop.permute.xlu0 %377
  %379 = vrot.lane.b32.xlu0 %v364, 17
  %v380 = vpop.permute.xlu0 %379
  %381 = vrot.lane.b32.xlu0 %v366, 17
  %v382 = vpop.permute.xlu0 %381
  %v383 = vsel %vm36, %v368, %v376
  %v384 = vsel %vm36, %v370, %v378
  %v385 = vsel %vm36, %v372, %v380
  %v386 = vsel %vm36, %v374, %v382
  %v387 = vsel %vm36, %v376, %v368
  %v388 = vsel %vm36, %v378, %v370
  %v389 = vsel %vm36, %v380, %v372
  %v390 = vsel %vm36, %v382, %v374
  %v391 = vsel %vm49, %v387, 0.0
  %v392 = vsel %vm50, %v383, 0.0
  %v393 = vsel %vm49, %v388, 0.0
  %v394 = vsel %vm50, %v384, 0.0
  %v395 = vsel %vm49, %v389, 0.0
  %v396 = vsel %vm50, %v385, 0.0
  %v397 = vsel %vm49, %v390, 0.0
  %v398 = vsel %vm50, %v386, 0.0
  %399 = vrot.lane.b32.xlu0 %v359, 16
  %v400 = vpop.permute.xlu0 %399
  %401 = vrot.lane.b32.xlu0 %v361, 16
  %v402 = vpop.permute.xlu0 %401
  %403 = vrot.lane.b32.xlu0 %v363, 16
  %v404 = vpop.permute.xlu0 %403
  %405 = vrot.lane.b32.xlu0 %v365, 16
  %v406 = vpop.permute.xlu0 %405
  %407 = vrot.lane.b32.xlu0 %v360, 16
  %v408 = vpop.permute.xlu0 %407
  %409 = vrot.lane.b32.xlu0 %v362, 16
  %v410 = vpop.permute.xlu0 %409
  %411 = vrot.lane.b32.xlu0 %v364, 16
  %v412 = vpop.permute.xlu0 %411
  %413 = vrot.lane.b32.xlu0 %v366, 16
  %v414 = vpop.permute.xlu0 %413
  %v415 = vsel %vm57, %v400, %v408
  %v416 = vsel %vm57, %v402, %v410
  %v417 = vsel %vm57, %v404, %v412
  %v418 = vsel %vm57, %v406, %v414
  %v419 = vsel %vm57, %v408, %v400
  %v420 = vsel %vm57, %v410, %v402
  %v421 = vsel %vm57, %v412, %v404
  %v422 = vsel %vm57, %v414, %v406
  %v423 = vsel %vm69, %v419, 0.0
  %v424 = vsel %vm70, %v415, 0.0
  %v425 = vsel %vm69, %v420, 0.0
  %v426 = vsel %vm70, %v416, 0.0
  %v427 = vsel %vm69, %v421, 0.0
  %v428 = vsel %vm70, %v417, 0.0
  %v429 = vsel %vm69, %v422, 0.0
  %v430 = vsel %vm70, %v418, 0.0
  %431 = vrot.lane.b32.xlu0 %v359, 15
  %v432 = vpop.permute.xlu0 %431
  %433 = vrot.lane.b32.xlu0 %v361, 15
  %v434 = vpop.permute.xlu0 %433
  %435 = vrot.lane.b32.xlu0 %v363, 15
  %v436 = vpop.permute.xlu0 %435
  %437 = vrot.lane.b32.xlu0 %v365, 15
  %v438 = vpop.permute.xlu0 %437
  %439 = vrot.lane.b32.xlu0 %v360, 15
  %v440 = vpop.permute.xlu0 %439
  %441 = vrot.lane.b32.xlu0 %v362, 15
  %v442 = vpop.permute.xlu0 %441
  %443 = vrot.lane.b32.xlu0 %v364, 15
  %v444 = vpop.permute.xlu0 %443
  %445 = vrot.lane.b32.xlu0 %v366, 15
  %v446 = vpop.permute.xlu0 %445
  %v447 = vsel %vm77, %v432, %v440
  %v448 = vsel %vm77, %v434, %v442
  %v449 = vsel %vm77, %v436, %v444
  %v450 = vsel %vm77, %v438, %v446
  %v451 = vsel %vm77, %v440, %v432
  %v452 = vsel %vm77, %v442, %v434
  %v453 = vsel %vm77, %v444, %v436
  %v454 = vsel %vm77, %v446, %v438
  %v455 = vsel %vm90, %v451, 0.0
  %v456 = vsel %vm91, %v447, 0.0
  %v457 = vsel %vm90, %v452, 0.0
  %v458 = vsel %vm91, %v448, 0.0
  %v459 = vsel %vm90, %v453, 0.0
  %v460 = vsel %vm91, %v449, 0.0
  %v461 = vsel %vm90, %v454, 0.0
  %v462 = vsel %vm91, %v450, 0.0
  %463 = vrot.lane.b32.xlu0 %v359, 1
  %v464 = vpop.permute.xlu0 %463
  %465 = vrot.lane.b32.xlu0 %v361, 1
  %v466 = vpop.permute.xlu0 %465
  %467 = vrot.lane.b32.xlu0 %v363, 1
  %v468 = vpop.permute.xlu0 %467
  %469 = vrot.lane.b32.xlu0 %v365, 1
  %v470 = vpop.permute.xlu0 %469
  %471 = vrot.lane.b32.xlu0 %v360, 1
  %v472 = vpop.permute.xlu0 %471
  %473 = vrot.lane.b32.xlu0 %v362, 1
  %v474 = vpop.permute.xlu0 %473
  %475 = vrot.lane.b32.xlu0 %v364, 1
  %v476 = vpop.permute.xlu0 %475
  %477 = vrot.lane.b32.xlu0 %v366, 1
  %v478 = vpop.permute.xlu0 %477
  %v479 = vsel %vm98, %v464, %v472
  %v480 = vsel %vm98, %v466, %v474
  %v481 = vsel %vm98, %v468, %v476
  %v482 = vsel %vm98, %v470, %v478
  %v483 = vsel %vm98, %v472, %v464
  %v484 = vsel %vm98, %v474, %v466
  %v485 = vsel %vm98, %v476, %v468
  %v486 = vsel %vm98, %v478, %v470
  %v487 = vsel %vm110, %v483, 0.0
  %v488 = vsel %vm111, %v479, 0.0
  %v489 = vsel %vm110, %v484, 0.0
  %v490 = vsel %vm111, %v480, 0.0
  %v491 = vsel %vm110, %v485, 0.0
  %v492 = vsel %vm111, %v481, 0.0
  %v493 = vsel %vm110, %v486, 0.0
  %v494 = vsel %vm111, %v482, 0.0
  %495 = vrot.lane.b32.xlu0 %v359, 127
  %v496 = vpop.permute.xlu0 %495
  %497 = vrot.lane.b32.xlu0 %v361, 127
  %v498 = vpop.permute.xlu0 %497
  %499 = vrot.lane.b32.xlu0 %v363, 127
  %v500 = vpop.permute.xlu0 %499
  %501 = vrot.lane.b32.xlu0 %v365, 127
  %v502 = vpop.permute.xlu0 %501
  %503 = vrot.lane.b32.xlu0 %v360, 127
  %v504 = vpop.permute.xlu0 %503
  %505 = vrot.lane.b32.xlu0 %v362, 127
  %v506 = vpop.permute.xlu0 %505
  %507 = vrot.lane.b32.xlu0 %v364, 127
  %v508 = vpop.permute.xlu0 %507
  %509 = vrot.lane.b32.xlu0 %v366, 127
  %v510 = vpop.permute.xlu0 %509
  %v511 = vsel %vm118, %v496, %v504
  %v512 = vsel %vm118, %v498, %v506
  %v513 = vsel %vm118, %v500, %v508
  %v514 = vsel %vm118, %v502, %v510
  %v515 = vsel %vm118, %v504, %v496
  %v516 = vsel %vm118, %v506, %v498
  %v517 = vsel %vm118, %v508, %v500
  %v518 = vsel %vm118, %v510, %v502
  %v519 = vsel %vm130, %v511, 0.0
  %v520 = vsel %vm131, %v515, 0.0
  %v521 = vsel %vm130, %v512, 0.0
  %v522 = vsel %vm131, %v516, 0.0
  %v523 = vsel %vm130, %v513, 0.0
  %v524 = vsel %vm131, %v517, 0.0
  %v525 = vsel %vm130, %v514, 0.0
  %v526 = vsel %vm131, %v518, 0.0
  %527 = vrot.lane.b32.xlu0 %v359, 113
  %v528 = vpop.permute.xlu0 %527
  %529 = vrot.lane.b32.xlu0 %v361, 113
  %v530 = vpop.permute.xlu0 %529
  %531 = vrot.lane.b32.xlu0 %v363, 113
  %v532 = vpop.permute.xlu0 %531
  %533 = vrot.lane.b32.xlu0 %v365, 113
  %v534 = vpop.permute.xlu0 %533
  %535 = vrot.lane.b32.xlu0 %v360, 113
  %v536 = vpop.permute.xlu0 %535
  %537 = vrot.lane.b32.xlu0 %v362, 113
  %v538 = vpop.permute.xlu0 %537
  %539 = vrot.lane.b32.xlu0 %v364, 113
  %v540 = vpop.permute.xlu0 %539
  %541 = vrot.lane.b32.xlu0 %v366, 113
  %v542 = vpop.permute.xlu0 %541
  %v543 = vsel %vm138, %v528, %v536
  %v544 = vsel %vm138, %v530, %v538
  %v545 = vsel %vm138, %v532, %v540
  %v546 = vsel %vm138, %v534, %v542
  %v547 = vsel %vm138, %v536, %v528
  %v548 = vsel %vm138, %v538, %v530
  %v549 = vsel %vm138, %v540, %v532
  %v550 = vsel %vm138, %v542, %v534
  %v551 = vsel %vm151, %v543, 0.0
  %v552 = vsel %vm152, %v547, 0.0
  %v553 = vsel %vm151, %v544, 0.0
  %v554 = vsel %vm152, %v548, 0.0
  %v555 = vsel %vm151, %v545, 0.0
  %v556 = vsel %vm152, %v549, 0.0
  %v557 = vsel %vm151, %v546, 0.0
  %v558 = vsel %vm152, %v550, 0.0
  %559 = vrot.lane.b32.xlu0 %v359, 112
  %v560 = vpop.permute.xlu0 %559
  %561 = vrot.lane.b32.xlu0 %v361, 112
  %v562 = vpop.permute.xlu0 %561
  %563 = vrot.lane.b32.xlu0 %v363, 112
  %v564 = vpop.permute.xlu0 %563
  %565 = vrot.lane.b32.xlu0 %v365, 112
  %v566 = vpop.permute.xlu0 %565
  %567 = vrot.lane.b32.xlu0 %v360, 112
  %v568 = vpop.permute.xlu0 %567
  %569 = vrot.lane.b32.xlu0 %v362, 112
  %v570 = vpop.permute.xlu0 %569
  %571 = vrot.lane.b32.xlu0 %v364, 112
  %v572 = vpop.permute.xlu0 %571
  %573 = vrot.lane.b32.xlu0 %v366, 112
  %v574 = vpop.permute.xlu0 %573
  %v575 = vsel %vm159, %v560, %v568
  %v576 = vsel %vm159, %v562, %v570
  %v577 = vsel %vm159, %v564, %v572
  %v578 = vsel %vm159, %v566, %v574
  %v579 = vsel %vm159, %v568, %v560
  %v580 = vsel %vm159, %v570, %v562
  %v581 = vsel %vm159, %v572, %v564
  %v582 = vsel %vm159, %v574, %v566
  %v583 = vsel %vm171, %v575, 0.0
  %v584 = vsel %vm172, %v579, 0.0
  %v585 = vsel %vm171, %v576, 0.0
  %v586 = vsel %vm172, %v580, 0.0
  %v587 = vsel %vm171, %v577, 0.0
  %v588 = vsel %vm172, %v581, 0.0
  %v589 = vsel %vm171, %v578, 0.0
  %v590 = vsel %vm172, %v582, 0.0
  %591 = vrot.lane.b32.xlu0 %v359, 111
  %v592 = vpop.permute.xlu0 %591
  %593 = vrot.lane.b32.xlu0 %v361, 111
  %v594 = vpop.permute.xlu0 %593
  %595 = vrot.lane.b32.xlu0 %v363, 111
  %v596 = vpop.permute.xlu0 %595
  %597 = vrot.lane.b32.xlu0 %v365, 111
  %v598 = vpop.permute.xlu0 %597
  %599 = vrot.lane.b32.xlu0 %v360, 111
  %v600 = vpop.permute.xlu0 %599
  %601 = vrot.lane.b32.xlu0 %v362, 111
  %v602 = vpop.permute.xlu0 %601
  %603 = vrot.lane.b32.xlu0 %v364, 111
  %v604 = vpop.permute.xlu0 %603
  %605 = vrot.lane.b32.xlu0 %v366, 111
  %v606 = vpop.permute.xlu0 %605
  %v607 = vsel %vm179, %v592, %v600
  %v608 = vsel %vm179, %v594, %v602
  %v609 = vsel %vm179, %v596, %v604
  %v610 = vsel %vm179, %v598, %v606
  %v611 = vsel %vm179, %v600, %v592
  %v612 = vsel %vm179, %v602, %v594
  %v613 = vsel %vm179, %v604, %v596
  %v614 = vsel %vm179, %v606, %v598
  %v615 = vsel %vm192, %v607, 0.0
  %v616 = vsel %vm193, %v611, 0.0
  %v617 = vsel %vm192, %v608, 0.0
  %v618 = vsel %vm193, %v612, 0.0
  %v619 = vsel %vm192, %v609, 0.0
  %v620 = vsel %vm193, %v613, 0.0
  %v621 = vsel %vm192, %v610, 0.0
  %v622 = vsel %vm193, %v614, 0.0
  %v623 = vpack.c.bf16 %v393, %v391
  %v624 = vpack.c.bf16 %v394, %v392
  %v625 = vpack.c.bf16 %v397, %v395
  %v626 = vpack.c.bf16 %v398, %v396
  %v627 = vpack.c.bf16 %v425, %v423
  %v628 = vpack.c.bf16 %v426, %v424
  %v629 = vpack.c.bf16 %v429, %v427
  %v630 = vpack.c.bf16 %v430, %v428
  %v631 = vpack.c.bf16 %v457, %v455
  %v632 = vpack.c.bf16 %v458, %v456
  %v633 = vpack.c.bf16 %v461, %v459
  %v634 = vpack.c.bf16 %v462, %v460
  %v635 = vpack.c.bf16 %v489, %v487
  %v636 = vpack.c.bf16 %v490, %v488
  %v637 = vpack.c.bf16 %v493, %v491
  %v638 = vpack.c.bf16 %v494, %v492
  %v639 = vpack.c.bf16 %v361, %v359
  %v640 = vpack.c.bf16 %v362, %v360
  %v641 = vpack.c.bf16 %v365, %v363
  %v642 = vpack.c.bf16 %v366, %v364
  %v643 = vpack.c.bf16 %v521, %v519
  %v644 = vpack.c.bf16 %v522, %v520
  %v645 = vpack.c.bf16 %v525, %v523
  %v646 = vpack.c.bf16 %v526, %v524
  %v647 = vpack.c.bf16 %v553, %v551
  %v648 = vpack.c.bf16 %v554, %v552
  %v649 = vpack.c.bf16 %v557, %v555
  %v650 = vpack.c.bf16 %v558, %v556
  %v651 = vpack.c.bf16 %v585, %v583
  %v652 = vpack.c.bf16 %v586, %v584
  %v653 = vpack.c.bf16 %v589, %v587
  %v654 = vpack.c.bf16 %v590, %v588
  %v655 = vpack.c.bf16 %v617, %v615
  %v656 = vpack.c.bf16 %v618, %v616
  %v657 = vpack.c.bf16 %v621, %v619
  %v658 = vpack.c.bf16 %v622, %v620
  %v659 = vld [vmem:[%s3] sm:$0xf]
  %v660 = vld [vmem:[%s3 + $0x4] sm:$0x3]
  %vm661 = vcmask 261120
  %v663 = vsel %vm661, %v660, 0
  %665 = vmatprep.subr.bf16.mxu0 %v656
  %666 = vmatpush1.bf16.msra.mxu0 %v655
  %667 = vmatprep.subr.bf16.mxu0 %v658
  %668 = vmatpush1.bf16.msra.mxu0 %v657
  %669 = vmatprep.subr.bf16.mxu0 0
  %670 = vmatpush1.bf16.msra.mxu0 0
  %671 = vmatprep.subr.bf16.mxu0 0
  %672 = vmatpush1.bf16.msra.mxu0 0
  %673 = vmatprep.subr.bf16.mxu0 0
  %674 = vmatpush1.bf16.msra.mxu0 0
  %675 = vmatprep.subr.bf16.mxu0 0
  %676 = vmatpush1.bf16.msra.mxu0 0
  %677 = vmatprep.subr.bf16.mxu0 0
  %678 = vmatpush1.bf16.msra.mxu0 0
  %679 = vmatprep.subr.bf16.mxu0 0
  %680 = vmatpush1.bf16.msra.mxu0 0
  %681 = vmatprep.subr.bf16.mxu0 0
  %682 = vmatpush1.bf16.msra.mxu0 0
  %683 = vmatprep.subr.bf16.mxu0 0
  %684 = vmatpush1.bf16.msra.mxu0 0
  %685 = vmatprep.subr.bf16.mxu0 0
  %686 = vmatpush1.bf16.msra.mxu0 0
  %687 = vmatprep.subr.bf16.mxu0 0
  %688 = vmatpush1.bf16.msra.mxu0 0
  %689 = vmatprep.subr.bf16.mxu0 0
  %690 = vmatpush1.bf16.msra.mxu0 0
  %691 = vmatprep.subr.bf16.mxu0 0
  %692 = vmatpush1.bf16.msra.mxu0 0
  %693 = vmatprep.subr.bf16.mxu0 0
  %694 = vmatpush1.bf16.msra.mxu0 0
  %695 = vmatprep.subr.bf16.mxu0 0
  %696 = vmatpush1.bf16.msra.mxu0 0
  %697 = vmatprep.mubr.bf16.mxu0 0
  %698 = vmatmul.mubr.bf16.gmra.mrb[0].mxu0 %v663
  %v699 = vpop.f32.mrb[0].mxu0
  %v700 = vadd.f32 0.0, %v699
  %v701 = vpop.f32.mrb[0].mxu0
  %v702 = vadd.f32 0.0, %v701
  %v703 = vpop.f32.mrb[0].mxu0
  %v704 = vpop.f32.mrb[0].mxu0
  %705 = vdwg.mxu0
  %v708 = vunpack.c.l.s4 1983009808
  %v709 = vunpack.c.0.s8 %v708
  %v710 = vlaneseq
  %v711 = vshrl.u32 %v710, 7
  %v712 = vsub.s32 %v709, %v711
  %v713 = vrot.slane %v659, %v712
  %v714 = vcombine.high %v713, %v713
  %717 = vmatprep.subr.bf16.mxu0 %v624
  %718 = vmatpush1.bf16.msra.mxu0 %v623
  %719 = vmatprep.subr.bf16.mxu0 %v626
  %720 = vmatpush1.bf16.msra.mxu0 %v625
  %721 = vmatprep.subr.bf16.mxu0 %v628
  %722 = vmatpush1.bf16.msra.mxu0 %v627
  %723 = vmatprep.subr.bf16.mxu0 %v630
  %724 = vmatpush1.bf16.msra.mxu0 %v629
  %725 = vmatprep.subr.bf16.mxu0 %v632
  %726 = vmatpush1.bf16.msra.mxu0 %v631
  %727 = vmatprep.subr.bf16.mxu0 %v634
  %728 = vmatpush1.bf16.msra.mxu0 %v633
  %729 = vmatprep.subr.bf16.mxu0 %v636
  %730 = vmatpush1.bf16.msra.mxu0 %v635
  %731 = vmatprep.subr.bf16.mxu0 %v638
  %732 = vmatpush1.bf16.msra.mxu0 %v637
  %733 = vmatprep.subr.bf16.mxu0 %v640
  %734 = vmatpush1.bf16.msra.mxu0 %v639
  %735 = vmatprep.subr.bf16.mxu0 %v642
  %736 = vmatpush1.bf16.msra.mxu0 %v641
  %737 = vmatprep.subr.bf16.mxu0 %v644
  %738 = vmatpush1.bf16.msra.mxu0 %v643
  %739 = vmatprep.subr.bf16.mxu0 %v646
  %740 = vmatpush1.bf16.msra.mxu0 %v645
  %741 = vmatprep.subr.bf16.mxu0 %v648
  %742 = vmatpush1.bf16.msra.mxu0 %v647
  %743 = vmatprep.subr.bf16.mxu0 %v650
  %744 = vmatpush1.bf16.msra.mxu0 %v649
  %745 = vmatprep.subr.bf16.mxu0 %v652
  %746 = vmatpush1.bf16.msra.mxu0 %v651
  %747 = vmatprep.subr.bf16.mxu0 %v654
  %748 = vmatpush1.bf16.msra.mxu0 %v653
  %749 = vmatprep.mubr.bf16.mxu0 %v714
  %750 = vmatmul.mubr.bf16.gmra.mrb[0].mxu0 %v713
  %v751 = vpop.f32.mrb[0].mxu0
  %v752 = vadd.f32 %v700, %v751
  %v753 = vpop.f32.mrb[0].mxu0
  %v754 = vadd.f32 %v702, %v753
  %v755 = vpop.f32.mrb[0].mxu0
  %v756 = vpop.f32.mrb[0].mxu0
  %757 = vdwg.mxu0
  %v758 = vld [vmem:[%s4 + $0x20] sm:$0xf]
  %760 = vset.pattern.permute.xlu0 0
  %761 = vperm.xlu0 %760, %v758
  %v762 = vpop.permute.xlu0 %761
  %v764 = vadd.f32 %v752, %v762
  %v765 = vadd.f32 %v754, %v762
  %v768 = vcombine.low %v764, %v765
  %770 = vst [vmem:[%s5] sm:$0xff] %v768
  %s771 = scalar_lea.vmem %s1, 16
  %v772 = vld [vmem:[%s771] sm:$0xff]
  %v773 = vld [vmem:[%s771 + $0x8] sm:$0xff]
  %774 = vrot.lane.b32.xlu0 %v772, 17
  %v775 = vpop.permute.xlu0 %774
  %776 = vrot.lane.b32.xlu0 %v773, 17
  %v777 = vpop.permute.xlu0 %776
  %v778 = vsel %vm36, %v775, %v777
  %v779 = vsel %vm36, %v777, %v775
  %v780 = vsel %vm49, %v779, 0.0
  %v781 = vsel %vm50, %v778, 0.0
  %782 = vrot.lane.b32.xlu0 %v772, 16
  %v783 = vpop.permute.xlu0 %782
  %784 = vrot.lane.b32.xlu0 %v773, 16
  %v785 = vpop.permute.xlu0 %784
  %v786 = vsel %vm57, %v783, %v785
  %v787 = vsel %vm57, %v785, %v783
  %v788 = vsel %vm69, %v787, 0.0
  %v789 = vsel %vm70, %v786, 0.0
  %790 = vrot.lane.b32.xlu0 %v772, 15
  %v791 = vpop.permute.xlu0 %790
  %792 = vrot.lane.b32.xlu0 %v773, 15
  %v793 = vpop.permute.xlu0 %792
  %v794 = vsel %vm77, %v791, %v793
  %v795 = vsel %vm77, %v793, %v791
  %v796 = vsel %vm90, %v795, 0.0
  %v797 = vsel %vm91, %v794, 0.0
  %798 = vrot.lane.b32.xlu0 %v772, 1
  %v799 = vpop.permute.xlu0 %798
  %800 = vrot.lane.b32.xlu0 %v773, 1
  %v801 = vpop.permute.xlu0 %800
  %v802 = vsel %vm98, %v799, %v801
  %v803 = vsel %vm98, %v801, %v799
  %v804 = vsel %vm110, %v803, 0.0
  %v805 = vsel %vm111, %v802, 0.0
  %806 = vrot.lane.b32.xlu0 %v772, 127
  %v807 = vpop.permute.xlu0 %806
  %808 = vrot.lane.b32.xlu0 %v773, 127
  %v809 = vpop.permute.xlu0 %808
  %v810 = vsel %vm118, %v807, %v809
  %v811 = vsel %vm118, %v809, %v807
  %v812 = vsel %vm130, %v810, 0.0
  %v813 = vsel %vm131, %v811, 0.0
  %814 = vrot.lane.b32.xlu0 %v772, 113
  %v815 = vpop.permute.xlu0 %814
  %816 = vrot.lane.b32.xlu0 %v773, 113
  %v817 = vpop.permute.xlu0 %816
  %v818 = vsel %vm138, %v815, %v817
  %v819 = vsel %vm138, %v817, %v815
  %v820 = vsel %vm151, %v818, 0.0
  %v821 = vsel %vm152, %v819, 0.0
  %822 = vrot.lane.b32.xlu0 %v772, 112
  %v823 = vpop.permute.xlu0 %822
  %824 = vrot.lane.b32.xlu0 %v773, 112
  %v825 = vpop.permute.xlu0 %824
  %v826 = vsel %vm159, %v823, %v825
  %v827 = vsel %vm159, %v825, %v823
  %v828 = vsel %vm171, %v826, 0.0
  %v829 = vsel %vm172, %v827, 0.0
  %830 = vrot.lane.b32.xlu0 %v772, 111
  %v831 = vpop.permute.xlu0 %830
  %832 = vrot.lane.b32.xlu0 %v773, 111
  %v833 = vpop.permute.xlu0 %832
  %v834 = vsel %vm179, %v831, %v833
  %v835 = vsel %vm179, %v833, %v831
  %v836 = vsel %vm192, %v834, 0.0
  %v837 = vsel %vm193, %v835, 0.0
  %v838 = vpack.c.bf16 %v788, %v780
  %v839 = vpack.c.bf16 %v789, %v781
  %v840 = vpack.c.bf16 %v804, %v796
  %v841 = vpack.c.bf16 %v805, %v797
  %v842 = vpack.c.bf16 %v812, %v772
  %v843 = vpack.c.bf16 %v813, %v773
  %v844 = vpack.c.bf16 %v828, %v820
  %v845 = vpack.c.bf16 %v829, %v821
  %v846 = vpack.c.bf16 %v836, %v836
  %v847 = vpack.c.bf16 %v837, %v837
  %v848 = vld [vmem:[%s2] sm:$0xf]
  %v849 = vld [vmem:[%s2 + $0x4] sm:$0xf]
  %v850 = vld [vmem:[%s2 + $0x8] sm:$0xf]
  %v851 = vld [vmem:[%s2 + $0xc] sm:$0xf]
  %v852 = vld [vmem:[%s4] sm:$0xff]
  %v853 = vld [vmem:[%s4 + $0x8] sm:$0xff]
  %v854 = vld [vmem:[%s4 + $0x10] sm:$0xff]
  %v855 = vld [vmem:[%s4 + $0x18] sm:$0xff]
  %857 = vset.pattern.permute.xlu0 1
  %858 = vperm.xlu0 %857, %v852
  %v859 = vpop.permute.xlu0 %858
  %862 = vset.pattern.permute.xlu0 1
  %863 = vperm.xlu0 %862, %v853
  %v864 = vpop.permute.xlu0 %863
  %867 = vset.pattern.permute.xlu0 1
  %868 = vperm.xlu0 %867, %v854
  %v869 = vpop.permute.xlu0 %868
  %872 = vset.pattern.permute.xlu0 1
  %873 = vperm.xlu0 %872, %v855
  %v874 = vpop.permute.xlu0 %873
  %v880 = vunpack.c.l.b16 %v848
  %v881 = vunpack.c.l.b16 %v849
  %v882 = vunpack.c.l.b16 %v850
  %v883 = vunpack.c.l.b16 %v851
  %v884 = vpack.c.b16 %v881, %v880
  %v885 = vpack.c.b16 %v883, %v882
  %v887 = vsel %vm244, %v884, 0
  %v890 = vsel %vm244, %v885, 0
  %v893 = vsel %vm251, %v846, 0
  %v896 = vsel %vm251, %v847, 0
  %898 = vmatprep.subr.bf16.mxu0 %v839
  %899 = vmatpush1.bf16.msra.mxu0 %v838
  %900 = vmatprep.subr.bf16.mxu0 %v841
  %901 = vmatpush1.bf16.msra.mxu0 %v840
  %902 = vmatprep.subr.bf16.mxu0 %v843
  %903 = vmatpush1.bf16.msra.mxu0 %v842
  %904 = vmatprep.subr.bf16.mxu0 %v845
  %905 = vmatpush1.bf16.msra.mxu0 %v844
  %906 = vmatprep.subr.bf16.mxu0 %v896
  %907 = vmatpush1.bf16.msra.mxu0 %v893
  %908 = vmatprep.subr.bf16.mxu0 0
  %909 = vmatpush1.bf16.msra.mxu0 0
  %910 = vmatprep.subr.bf16.mxu0 0
  %911 = vmatpush1.bf16.msra.mxu0 0
  %912 = vmatprep.subr.bf16.mxu0 0
  %913 = vmatpush1.bf16.msra.mxu0 0
  %914 = vmatprep.subr.bf16.mxu0 0
  %915 = vmatpush1.bf16.msra.mxu0 0
  %916 = vmatprep.subr.bf16.mxu0 0
  %917 = vmatpush1.bf16.msra.mxu0 0
  %918 = vmatprep.subr.bf16.mxu0 0
  %919 = vmatpush1.bf16.msra.mxu0 0
  %920 = vmatprep.subr.bf16.mxu0 0
  %921 = vmatpush1.bf16.msra.mxu0 0
  %922 = vmatprep.subr.bf16.mxu0 0
  %923 = vmatpush1.bf16.msra.mxu0 0
  %924 = vmatprep.subr.bf16.mxu0 0
  %925 = vmatpush1.bf16.msra.mxu0 0
  %926 = vmatprep.subr.bf16.mxu0 0
  %927 = vmatpush1.bf16.msra.mxu0 0
  %928 = vmatprep.subr.bf16.mxu0 0
  %929 = vmatpush1.bf16.msra.mxu0 0
  %930 = vmatprep.mubr.bf16.mxu0 0
  %931 = vmatmul.mubr.bf16.gmra.mrb[0].mxu0 %v887
  %v932 = vpop.f32.mrb[0].mxu0
  %v933 = vadd.f32 %v859, %v932
  %v934 = vpop.f32.mrb[0].mxu0
  %v935 = vadd.f32 %v859, %v934
  %v936 = vpop.f32.mrb[0].mxu0
  %v937 = vadd.f32 %v864, %v936
  %v938 = vpop.f32.mrb[0].mxu0
  %v939 = vadd.f32 %v864, %v938
  %940 = vmatprep.mubr.bf16.mxu0 0
  %941 = vmatmul.mubr.bf16.gmra.mrb[0].mxu0 %v890
  %v942 = vpop.f32.mrb[0].mxu0
  %v943 = vadd.f32 %v869, %v942
  %v944 = vpop.f32.mrb[0].mxu0
  %v945 = vadd.f32 %v869, %v944
  %v946 = vpop.f32.mrb[0].mxu0
  %v947 = vadd.f32 %v874, %v946
  %v948 = vpop.f32.mrb[0].mxu0
  %v949 = vadd.f32 %v874, %v948
  %950 = vdwg.mxu0
  %v951 = vxor.u32 %v933, 2147483648
  %v952 = vxor.u32 %v935, 2147483648
  %v953 = vxor.u32 %v937, 2147483648
  %v954 = vxor.u32 %v939, 2147483648
  %v955 = vxor.u32 %v943, 2147483648
  %v956 = vxor.u32 %v945, 2147483648
  %v957 = vxor.u32 %v947, 2147483648
  %v958 = vxor.u32 %v949, 2147483648
  %v959 = vmul.f32 %v951, 1.442695
  %v960 = vpow.pop %v959
  %v961 = vmul.f32 %v952, 1.442695
  %v962 = vpow.pop %v961
  %v963 = vmul.f32 %v953, 1.442695
  %v964 = vpow.pop %v963
  %v965 = vmul.f32 %v954, 1.442695
  %v966 = vpow.pop %v965
  %v967 = vmul.f32 %v955, 1.442695
  %v968 = vpow.pop %v967
  %v969 = vmul.f32 %v956, 1.442695
  %v970 = vpow.pop %v969
  %v971 = vmul.f32 %v957, 1.442695
  %v972 = vpow.pop %v971
  %v973 = vmul.f32 %v958, 1.442695
  %v974 = vpow.pop %v973
  %v975 = vadd.f32 %v960, 1.0
  %v976 = vadd.f32 %v962, 1.0
  %v977 = vadd.f32 %v964, 1.0
  %v978 = vadd.f32 %v966, 1.0
  %v979 = vadd.f32 %v968, 1.0
  %v980 = vadd.f32 %v970, 1.0
  %v981 = vadd.f32 %v972, 1.0
  %v982 = vadd.f32 %v974, 1.0
  %v983 = vrcp.pop %v975
  %v984 = vmul.f32 1.0, %v983
  %v985 = vrcp.pop %v976
  %v986 = vmul.f32 1.0, %v985
  %v987 = vrcp.pop %v977
  %v988 = vmul.f32 1.0, %v987
  %v989 = vrcp.pop %v978
  %v990 = vmul.f32 1.0, %v989
  %v991 = vrcp.pop %v979
  %v992 = vmul.f32 1.0, %v991
  %v993 = vrcp.pop %v980
  %v994 = vmul.f32 1.0, %v993
  %v995 = vrcp.pop %v981
  %v996 = vmul.f32 1.0, %v995
  %v997 = vrcp.pop %v982
  %v998 = vmul.f32 1.0, %v997
  %v999 = vmul.f32 %v933, %v984
  %v1000 = vmul.f32 %v935, %v986
  %v1001 = vmul.f32 %v937, %v988
  %v1002 = vmul.f32 %v939, %v990
  %v1003 = vmul.f32 %v943, %v992
  %v1004 = vmul.f32 %v945, %v994
  %v1005 = vmul.f32 %v947, %v996
  %v1006 = vmul.f32 %v949, %v998
  %1007 = vrot.lane.b32.xlu0 %v999, 17
  %v1008 = vpop.permute.xlu0 %1007
  %1009 = vrot.lane.b32.xlu0 %v1001, 17
  %v1010 = vpop.permute.xlu0 %1009
  %1011 = vrot.lane.b32.xlu0 %v1003, 17
  %v1012 = vpop.permute.xlu0 %1011
  %1013 = vrot.lane.b32.xlu0 %v1005, 17
  %v1014 = vpop.permute.xlu0 %1013
  %1015 = vrot.lane.b32.xlu0 %v1000, 17
  %v1016 = vpop.permute.xlu0 %1015
  %1017 = vrot.lane.b32.xlu0 %v1002, 17
  %v1018 = vpop.permute.xlu0 %1017
  %1019 = vrot.lane.b32.xlu0 %v1004, 17
  %v1020 = vpop.permute.xlu0 %1019
  %1021 = vrot.lane.b32.xlu0 %v1006, 17
  %v1022 = vpop.permute.xlu0 %1021
  %v1023 = vsel %vm36, %v1008, %v1016
  %v1024 = vsel %vm36, %v1010, %v1018
  %v1025 = vsel %vm36, %v1012, %v1020
  %v1026 = vsel %vm36, %v1014, %v1022
  %v1027 = vsel %vm36, %v1016, %v1008
  %v1028 = vsel %vm36, %v1018, %v1010
  %v1029 = vsel %vm36, %v1020, %v1012
  %v1030 = vsel %vm36, %v1022, %v1014
  %v1031 = vsel %vm49, %v1027, 0.0
  %v1032 = vsel %vm50, %v1023, 0.0
  %v1033 = vsel %vm49, %v1028, 0.0
  %v1034 = vsel %vm50, %v1024, 0.0
  %v1035 = vsel %vm49, %v1029, 0.0
  %v1036 = vsel %vm50, %v1025, 0.0
  %v1037 = vsel %vm49, %v1030, 0.0
  %v1038 = vsel %vm50, %v1026, 0.0
  %1039 = vrot.lane.b32.xlu0 %v999, 16
  %v1040 = vpop.permute.xlu0 %1039
  %1041 = vrot.lane.b32.xlu0 %v1001, 16
  %v1042 = vpop.permute.xlu0 %1041
  %1043 = vrot.lane.b32.xlu0 %v1003, 16
  %v1044 = vpop.permute.xlu0 %1043
  %1045 = vrot.lane.b32.xlu0 %v1005, 16
  %v1046 = vpop.permute.xlu0 %1045
  %1047 = vrot.lane.b32.xlu0 %v1000, 16
  %v1048 = vpop.permute.xlu0 %1047
  %1049 = vrot.lane.b32.xlu0 %v1002, 16
  %v1050 = vpop.permute.xlu0 %1049
  %1051 = vrot.lane.b32.xlu0 %v1004, 16
  %v1052 = vpop.permute.xlu0 %1051
  %1053 = vrot.lane.b32.xlu0 %v1006, 16
  %v1054 = vpop.permute.xlu0 %1053
  %v1055 = vsel %vm57, %v1040, %v1048
  %v1056 = vsel %vm57, %v1042, %v1050
  %v1057 = vsel %vm57, %v1044, %v1052
  %v1058 = vsel %vm57, %v1046, %v1054
  %v1059 = vsel %vm57, %v1048, %v1040
  %v1060 = vsel %vm57, %v1050, %v1042
  %v1061 = vsel %vm57, %v1052, %v1044
  %v1062 = vsel %vm57, %v1054, %v1046
  %v1063 = vsel %vm69, %v1059, 0.0
  %v1064 = vsel %vm70, %v1055, 0.0
  %v1065 = vsel %vm69, %v1060, 0.0
  %v1066 = vsel %vm70, %v1056, 0.0
  %v1067 = vsel %vm69, %v1061, 0.0
  %v1068 = vsel %vm70, %v1057, 0.0
  %v1069 = vsel %vm69, %v1062, 0.0
  %v1070 = vsel %vm70, %v1058, 0.0
  %1071 = vrot.lane.b32.xlu0 %v999, 15
  %v1072 = vpop.permute.xlu0 %1071
  %1073 = vrot.lane.b32.xlu0 %v1001, 15
  %v1074 = vpop.permute.xlu0 %1073
  %1075 = vrot.lane.b32.xlu0 %v1003, 15
  %v1076 = vpop.permute.xlu0 %1075
  %1077 = vrot.lane.b32.xlu0 %v1005, 15
  %v1078 = vpop.permute.xlu0 %1077
  %1079 = vrot.lane.b32.xlu0 %v1000, 15
  %v1080 = vpop.permute.xlu0 %1079
  %1081 = vrot.lane.b32.xlu0 %v1002, 15
  %v1082 = vpop.permute.xlu0 %1081
  %1083 = vrot.lane.b32.xlu0 %v1004, 15
  %v1084 = vpop.permute.xlu0 %1083
  %1085 = vrot.lane.b32.xlu0 %v1006, 15
  %v1086 = vpop.permute.xlu0 %1085
  %v1087 = vsel %vm77, %v1072, %v1080
  %v1088 = vsel %vm77, %v1074, %v1082
  %v1089 = vsel %vm77, %v1076, %v1084
  %v1090 = vsel %vm77, %v1078, %v1086
  %v1091 = vsel %vm77, %v1080, %v1072
  %v1092 = vsel %vm77, %v1082, %v1074
  %v1093 = vsel %vm77, %v1084, %v1076
  %v1094 = vsel %vm77, %v1086, %v1078
  %v1095 = vsel %vm90, %v1091, 0.0
  %v1096 = vsel %vm91, %v1087, 0.0
  %v1097 = vsel %vm90, %v1092, 0.0
  %v1098 = vsel %vm91, %v1088, 0.0
  %v1099 = vsel %vm90, %v1093, 0.0
  %v1100 = vsel %vm91, %v1089, 0.0
  %v1101 = vsel %vm90, %v1094, 0.0
  %v1102 = vsel %vm91, %v1090, 0.0
  %1103 = vrot.lane.b32.xlu0 %v999, 1
  %v1104 = vpop.permute.xlu0 %1103
  %1105 = vrot.lane.b32.xlu0 %v1001, 1
  %v1106 = vpop.permute.xlu0 %1105
  %1107 = vrot.lane.b32.xlu0 %v1003, 1
  %v1108 = vpop.permute.xlu0 %1107
  %1109 = vrot.lane.b32.xlu0 %v1005, 1
  %v1110 = vpop.permute.xlu0 %1109
  %1111 = vrot.lane.b32.xlu0 %v1000, 1
  %v1112 = vpop.permute.xlu0 %1111
  %1113 = vrot.lane.b32.xlu0 %v1002, 1
  %v1114 = vpop.permute.xlu0 %1113
  %1115 = vrot.lane.b32.xlu0 %v1004, 1
  %v1116 = vpop.permute.xlu0 %1115
  %1117 = vrot.lane.b32.xlu0 %v1006, 1
  %v1118 = vpop.permute.xlu0 %1117
  %v1119 = vsel %vm98, %v1104, %v1112
  %v1120 = vsel %vm98, %v1106, %v1114
  %v1121 = vsel %vm98, %v1108, %v1116
  %v1122 = vsel %vm98, %v1110, %v1118
  %v1123 = vsel %vm98, %v1112, %v1104
  %v1124 = vsel %vm98, %v1114, %v1106
  %v1125 = vsel %vm98, %v1116, %v1108
  %v1126 = vsel %vm98, %v1118, %v1110
  %v1127 = vsel %vm110, %v1123, 0.0
  %v1128 = vsel %vm111, %v1119, 0.0
  %v1129 = vsel %vm110, %v1124, 0.0
  %v1130 = vsel %vm111, %v1120, 0.0
  %v1131 = vsel %vm110, %v1125, 0.0
  %v1132 = vsel %vm111, %v1121, 0.0
  %v1133 = vsel %vm110, %v1126, 0.0
  %v1134 = vsel %vm111, %v1122, 0.0
  %1135 = vrot.lane.b32.xlu0 %v999, 127
  %v1136 = vpop.permute.xlu0 %1135
  %1137 = vrot.lane.b32.xlu0 %v1001, 127
  %v1138 = vpop.permute.xlu0 %1137
  %1139 = vrot.lane.b32.xlu0 %v1003, 127
  %v1140 = vpop.permute.xlu0 %1139
  %1141 = vrot.lane.b32.xlu0 %v1005, 127
  %v1142 = vpop.permute.xlu0 %1141
  %1143 = vrot.lane.b32.xlu0 %v1000, 127
  %v1144 = vpop.permute.xlu0 %1143
  %1145 = vrot.lane.b32.xlu0 %v1002, 127
  %v1146 = vpop.permute.xlu0 %1145
  %1147 = vrot.lane.b32.xlu0 %v1004, 127
  %v1148 = vpop.permute.xlu0 %1147
  %1149 = vrot.lane.b32.xlu0 %v1006, 127
  %v1150 = vpop.permute.xlu0 %1149
  %v1151 = vsel %vm118, %v1136, %v1144
  %v1152 = vsel %vm118, %v1138, %v1146
  %v1153 = vsel %vm118, %v1140, %v1148
  %v1154 = vsel %vm118, %v1142, %v1150
  %v1155 = vsel %vm118, %v1144, %v1136
  %v1156 = vsel %vm118, %v1146, %v1138
  %v1157 = vsel %vm118, %v1148, %v1140
  %v1158 = vsel %vm118, %v1150, %v1142
  %v1159 = vsel %vm130, %v1151, 0.0
  %v1160 = vsel %vm131, %v1155, 0.0
  %v1161 = vsel %vm130, %v1152, 0.0
  %v1162 = vsel %vm131, %v1156, 0.0
  %v1163 = vsel %vm130, %v1153, 0.0
  %v1164 = vsel %vm131, %v1157, 0.0
  %v1165 = vsel %vm130, %v1154, 0.0
  %v1166 = vsel %vm131, %v1158, 0.0
  %1167 = vrot.lane.b32.xlu0 %v999, 113
  %v1168 = vpop.permute.xlu0 %1167
  %1169 = vrot.lane.b32.xlu0 %v1001, 113
  %v1170 = vpop.permute.xlu0 %1169
  %1171 = vrot.lane.b32.xlu0 %v1003, 113
  %v1172 = vpop.permute.xlu0 %1171
  %1173 = vrot.lane.b32.xlu0 %v1005, 113
  %v1174 = vpop.permute.xlu0 %1173
  %1175 = vrot.lane.b32.xlu0 %v1000, 113
  %v1176 = vpop.permute.xlu0 %1175
  %1177 = vrot.lane.b32.xlu0 %v1002, 113
  %v1178 = vpop.permute.xlu0 %1177
  %1179 = vrot.lane.b32.xlu0 %v1004, 113
  %v1180 = vpop.permute.xlu0 %1179
  %1181 = vrot.lane.b32.xlu0 %v1006, 113
  %v1182 = vpop.permute.xlu0 %1181
  %v1183 = vsel %vm138, %v1168, %v1176
  %v1184 = vsel %vm138, %v1170, %v1178
  %v1185 = vsel %vm138, %v1172, %v1180
  %v1186 = vsel %vm138, %v1174, %v1182
  %v1187 = vsel %vm138, %v1176, %v1168
  %v1188 = vsel %vm138, %v1178, %v1170
  %v1189 = vsel %vm138, %v1180, %v1172
  %v1190 = vsel %vm138, %v1182, %v1174
  %v1191 = vsel %vm151, %v1183, 0.0
  %v1192 = vsel %vm152, %v1187, 0.0
  %v1193 = vsel %vm151, %v1184, 0.0
  %v1194 = vsel %vm152, %v1188, 0.0
  %v1195 = vsel %vm151, %v1185, 0.0
  %v1196 = vsel %vm152, %v1189, 0.0
  %v1197 = vsel %vm151, %v1186, 0.0
  %v1198 = vsel %vm152, %v1190, 0.0
  %1199 = vrot.lane.b32.xlu0 %v999, 112
  %v1200 = vpop.permute.xlu0 %1199
  %1201 = vrot.lane.b32.xlu0 %v1001, 112
  %v1202 = vpop.permute.xlu0 %1201
  %1203 = vrot.lane.b32.xlu0 %v1003, 112
  %v1204 = vpop.permute.xlu0 %1203
  %1205 = vrot.lane.b32.xlu0 %v1005, 112
  %v1206 = vpop.permute.xlu0 %1205
  %1207 = vrot.lane.b32.xlu0 %v1000, 112
  %v1208 = vpop.permute.xlu0 %1207
  %1209 = vrot.lane.b32.xlu0 %v1002, 112
  %v1210 = vpop.permute.xlu0 %1209
  %1211 = vrot.lane.b32.xlu0 %v1004, 112
  %v1212 = vpop.permute.xlu0 %1211
  %1213 = vrot.lane.b32.xlu0 %v1006, 112
  %v1214 = vpop.permute.xlu0 %1213
  %v1215 = vsel %vm159, %v1200, %v1208
  %v1216 = vsel %vm159, %v1202, %v1210
  %v1217 = vsel %vm159, %v1204, %v1212
  %v1218 = vsel %vm159, %v1206, %v1214
  %v1219 = vsel %vm159, %v1208, %v1200
  %v1220 = vsel %vm159, %v1210, %v1202
  %v1221 = vsel %vm159, %v1212, %v1204
  %v1222 = vsel %vm159, %v1214, %v1206
  %v1223 = vsel %vm171, %v1215, 0.0
  %v1224 = vsel %vm172, %v1219, 0.0
  %v1225 = vsel %vm171, %v1216, 0.0
  %v1226 = vsel %vm172, %v1220, 0.0
  %v1227 = vsel %vm171, %v1217, 0.0
  %v1228 = vsel %vm172, %v1221, 0.0
  %v1229 = vsel %vm171, %v1218, 0.0
  %v1230 = vsel %vm172, %v1222, 0.0
  %1231 = vrot.lane.b32.xlu0 %v999, 111
  %v1232 = vpop.permute.xlu0 %1231
  %1233 = vrot.lane.b32.xlu0 %v1001, 111
  %v1234 = vpop.permute.xlu0 %1233
  %1235 = vrot.lane.b32.xlu0 %v1003, 111
  %v1236 = vpop.permute.xlu0 %1235
  %1237 = vrot.lane.b32.xlu0 %v1005, 111
  %v1238 = vpop.permute.xlu0 %1237
  %1239 = vrot.lane.b32.xlu0 %v1000, 111
  %v1240 = vpop.permute.xlu0 %1239
  %1241 = vrot.lane.b32.xlu0 %v1002, 111
  %v1242 = vpop.permute.xlu0 %1241
  %1243 = vrot.lane.b32.xlu0 %v1004, 111
  %v1244 = vpop.permute.xlu0 %1243
  %1245 = vrot.lane.b32.xlu0 %v1006, 111
  %v1246 = vpop.permute.xlu0 %1245
  %v1247 = vsel %vm179, %v1232, %v1240
  %v1248 = vsel %vm179, %v1234, %v1242
  %v1249 = vsel %vm179, %v1236, %v1244
  %v1250 = vsel %vm179, %v1238, %v1246
  %v1251 = vsel %vm179, %v1240, %v1232
  %v1252 = vsel %vm179, %v1242, %v1234
  %v1253 = vsel %vm179, %v1244, %v1236
  %v1254 = vsel %vm179, %v1246, %v1238
  %v1255 = vsel %vm192, %v1247, 0.0
  %v1256 = vsel %vm193, %v1251, 0.0
  %v1257 = vsel %vm192, %v1248, 0.0
  %v1258 = vsel %vm193, %v1252, 0.0
  %v1259 = vsel %vm192, %v1249, 0.0
  %v1260 = vsel %vm193, %v1253, 0.0
  %v1261 = vsel %vm192, %v1250, 0.0
  %v1262 = vsel %vm193, %v1254, 0.0
  %v1263 = vpack.c.bf16 %v1033, %v1031
  %v1264 = vpack.c.bf16 %v1034, %v1032
  %v1265 = vpack.c.bf16 %v1037, %v1035
  %v1266 = vpack.c.bf16 %v1038, %v1036
  %v1267 = vpack.c.bf16 %v1065, %v1063
  %v1268 = vpack.c.bf16 %v1066, %v1064
  %v1269 = vpack.c.bf16 %v1069, %v1067
  %v1270 = vpack.c.bf16 %v1070, %v1068
  %v1271 = vpack.c.bf16 %v1097, %v1095
  %v1272 = vpack.c.bf16 %v1098, %v1096
  %v1273 = vpack.c.bf16 %v1101, %v1099
  %v1274 = vpack.c.bf16 %v1102, %v1100
  %v1275 = vpack.c.bf16 %v1129, %v1127
  %v1276 = vpack.c.bf16 %v1130, %v1128
  %v1277 = vpack.c.bf16 %v1133, %v1131
  %v1278 = vpack.c.bf16 %v1134, %v1132
  %v1279 = vpack.c.bf16 %v1001, %v999
  %v1280 = vpack.c.bf16 %v1002, %v1000
  %v1281 = vpack.c.bf16 %v1005, %v1003
  %v1282 = vpack.c.bf16 %v1006, %v1004
  %v1283 = vpack.c.bf16 %v1161, %v1159
  %v1284 = vpack.c.bf16 %v1162, %v1160
  %v1285 = vpack.c.bf16 %v1165, %v1163
  %v1286 = vpack.c.bf16 %v1166, %v1164
  %v1287 = vpack.c.bf16 %v1193, %v1191
  %v1288 = vpack.c.bf16 %v1194, %v1192
  %v1289 = vpack.c.bf16 %v1197, %v1195
  %v1290 = vpack.c.bf16 %v1198, %v1196
  %v1291 = vpack.c.bf16 %v1225, %v1223
  %v1292 = vpack.c.bf16 %v1226, %v1224
  %v1293 = vpack.c.bf16 %v1229, %v1227
  %v1294 = vpack.c.bf16 %v1230, %v1228
  %v1295 = vpack.c.bf16 %v1257, %v1255
  %v1296 = vpack.c.bf16 %v1258, %v1256
  %v1297 = vpack.c.bf16 %v1261, %v1259
  %v1298 = vpack.c.bf16 %v1262, %v1260
  %v1299 = vld [vmem:[%s3] sm:$0xf]
  %v1300 = vld [vmem:[%s3 + $0x4] sm:$0x3]
  %v1302 = vsel %vm661, %v1300, 0
  %1304 = vmatprep.subr.bf16.mxu0 %v1296
  %1305 = vmatpush1.bf16.msra.mxu0 %v1295
  %1306 = vmatprep.subr.bf16.mxu0 %v1298
  %1307 = vmatpush1.bf16.msra.mxu0 %v1297
  %1308 = vmatprep.subr.bf16.mxu0 0
  %1309 = vmatpush1.bf16.msra.mxu0 0
  %1310 = vmatprep.subr.bf16.mxu0 0
  %1311 = vmatpush1.bf16.msra.mxu0 0
  %1312 = vmatprep.subr.bf16.mxu0 0
  %1313 = vmatpush1.bf16.msra.mxu0 0
  %1314 = vmatprep.subr.bf16.mxu0 0
  %1315 = vmatpush1.bf16.msra.mxu0 0
  %1316 = vmatprep.subr.bf16.mxu0 0
  %1317 = vmatpush1.bf16.msra.mxu0 0
  %1318 = vmatprep.subr.bf16.mxu0 0
  %1319 = vmatpush1.bf16.msra.mxu0 0
  %1320 = vmatprep.subr.bf16.mxu0 0
  %1321 = vmatpush1.bf16.msra.mxu0 0
  %1322 = vmatprep.subr.bf16.mxu0 0
  %1323 = vmatpush1.bf16.msra.mxu0 0
  %1324 = vmatprep.subr.bf16.mxu0 0
  %1325 = vmatpush1.bf16.msra.mxu0 0
  %1326 = vmatprep.subr.bf16.mxu0 0
  %1327 = vmatpush1.bf16.msra.mxu0 0
  %1328 = vmatprep.subr.bf16.mxu0 0
  %1329 = vmatpush1.bf16.msra.mxu0 0
  %1330 = vmatprep.subr.bf16.mxu0 0
  %1331 = vmatpush1.bf16.msra.mxu0 0
  %1332 = vmatprep.subr.bf16.mxu0 0
  %1333 = vmatpush1.bf16.msra.mxu0 0
  %1334 = vmatprep.subr.bf16.mxu0 0
  %1335 = vmatpush1.bf16.msra.mxu0 0
  %1336 = vmatprep.mubr.bf16.mxu0 0
  %1337 = vmatmul.mubr.bf16.gmra.mrb[0].mxu0 %v1302
  %v1338 = vpop.f32.mrb[0].mxu0
  %v1339 = vadd.f32 0.0, %v1338
  %v1340 = vpop.f32.mrb[0].mxu0
  %v1341 = vadd.f32 0.0, %v1340
  %v1342 = vpop.f32.mrb[0].mxu0
  %v1343 = vpop.f32.mrb[0].mxu0
  %1344 = vdwg.mxu0
  %v1347 = vunpack.c.l.s4 1983009808
  %v1348 = vunpack.c.0.s8 %v1347
  %v1349 = vlaneseq
  %v1350 = vshrl.u32 %v1349, 7
  %v1351 = vsub.s32 %v1348, %v1350
  %v1352 = vrot.slane %v1299, %v1351
  %v1353 = vcombine.high %v1352, %v1352
  %1356 = vmatprep.subr.bf16.mxu0 %v1264
  %1357 = vmatpush1.bf16.msra.mxu0 %v1263
  %1358 = vmatprep.subr.bf16.mxu0 %v1266
  %1359 = vmatpush1.bf16.msra.mxu0 %v1265
  %1360 = vmatprep.subr.bf16.mxu0 %v1268
  %1361 = vmatpush1.bf16.msra.mxu0 %v1267
  %1362 = vmatprep.subr.bf16.mxu0 %v1270
  %1363 = vmatpush1.bf16.msra.mxu0 %v1269
  %1364 = vmatprep.subr.bf16.mxu0 %v1272
  %1365 = vmatpush1.bf16.msra.mxu0 %v1271
  %1366 = vmatprep.subr.bf16.mxu0 %v1274
  %1367 = vmatpush1.bf16.msra.mxu0 %v1273
  %1368 = vmatprep.subr.bf16.mxu0 %v1276
  %1369 = vmatpush1.bf16.msra.mxu0 %v1275
  %1370 = vmatprep.subr.bf16.mxu0 %v1278
  %1371 = vmatpush1.bf16.msra.mxu0 %v1277
  %1372 = vmatprep.subr.bf16.mxu0 %v1280
  %1373 = vmatpush1.bf16.msra.mxu0 %v1279
  %1374 = vmatprep.subr.bf16.mxu0 %v1282
  %1375 = vmatpush1.bf16.msra.mxu0 %v1281
  %1376 = vmatprep.subr.bf16.mxu0 %v1284
  %1377 = vmatpush1.bf16.msra.mxu0 %v1283
  %1378 = vmatprep.subr.bf16.mxu0 %v1286
  %1379 = vmatpush1.bf16.msra.mxu0 %v1285
  %1380 = vmatprep.subr.bf16.mxu0 %v1288
  %1381 = vmatpush1.bf16.msra.mxu0 %v1287
  %1382 = vmatprep.subr.bf16.mxu0 %v1290
  %1383 = vmatpush1.bf16.msra.mxu0 %v1289
  %1384 = vmatprep.subr.bf16.mxu0 %v1292
  %1385 = vmatpush1.bf16.msra.mxu0 %v1291
  %1386 = vmatprep.subr.bf16.mxu0 %v1294
  %1387 = vmatpush1.bf16.msra.mxu0 %v1293
  %1388 = vmatprep.mubr.bf16.mxu0 %v1353
  %1389 = vmatmul.mubr.bf16.gmra.mrb[0].mxu0 %v1352
  %v1390 = vpop.f32.mrb[0].mxu0
  %v1391 = vadd.f32 %v1339, %v1390
  %v1392 = vpop.f32.mrb[0].mxu0
  %v1393 = vadd.f32 %v1341, %v1392
  %v1394 = vpop.f32.mrb[0].mxu0
  %v1395 = vpop.f32.mrb[0].mxu0
  %1396 = vdwg.mxu0
  %v1397 = vld [vmem:[%s4 + $0x20] sm:$0xf]
  %1399 = vset.pattern.permute.xlu0 1
  %1400 = vperm.xlu0 %1399, %v1397
  %v1401 = vpop.permute.xlu0 %1400
  %v1403 = vadd.f32 %v1391, %v1401
  %v1404 = vadd.f32 %v1393, %v1401
  %v1407 = vcombine.low %v1403, %v1404
  %s1409 = scalar_lea.vmem %s5, 8
  %1410 = vst [vmem:[%s1409] sm:$0xff] %v1407
  // Predicated region
  $region22: #{latent_diffusion_forward.1} parent=0 // pred_check
    _
  $region23: #{latent_diffusion_forward.1} parent=0 // pred_check_branch
    %1412 = sbr.rel (0) target = $region25
  $region24: #{latent_diffusion_forward.1} parent=0 // pred_region
    _
  $region25: #{latent_diffusion_forward.1} parent=0 // pred_fallthru
    _
  // Predicated region
  $region26: #{latent_diffusion_forward.1} parent=0 // pred_check
    _
  $region27: #{latent_diffusion_forward.1} parent=0 // pred_check_branch
    %1414 = sbr.rel (0) target = $region29
  $region28: #{latent_diffusion_forward.1} parent=0 // pred_region
    _
  $region29: #{latent_diffusion_forward.1} parent=0 // pred_fallthru
    _

</llo_original>
